<compile_context>
chip_gen: v6e
topology: v6e:2x2x1
jax: 0.10.0
libtpu: 0.0.40
codegen_flags: <defaults>
</compile_context>

<pallas_src>
import math
import functools

import jax
import jax.numpy as jnp
from jax.experimental import pallas as pl
from jax.experimental.pallas import tpu as pltpu

# Stand-ins for the D.* config used by the torch module (small, deterministic).
IMSIZE = 32            # D.IMSIZE.get()
TEXTURE_SIZE = 4       # D.TEXTURE_SIZE()
CAM_DISTANCE = 2.732   # D.CAM_DISTANCE()
VIEWING_ANGLE = 30.0   # neural_renderer default viewing angle
AMBIENT = 2.0          # renderer.light_intensity_ambient (directional = 0.0)

PIX_LANES = 128        # lane width of the flattened pixel slab
REC = 16               # floats per (iteration, face) record in SMEM


# ============================ fused Pallas kernel =============================

def fused_render_loss_kernel(coef_ref, const_ref, out_ref, *,
                             n_faces, iters_per_step):
    # coef_ref : (iters * F * 16,) f32 SMEM  per-(iter,face) record:
    #            [a0,b0,c0, a1,b1,c1, a2,b2,c2, P,Q,R, cr,cg,cb, pad]
    #            (edge coeffs already sign(area)-folded; degenerate faces are
    #             encoded so they can never be hit)
    # const_ref: (5, 8, 128)       f32 VMEM  [xn, yn, style_r, style_g, style_b]
    #            resident across the whole grid (constant index map)
    # out_ref  : (1, 8, 128)       f32 VMEM  per-step per-pixel squared residual
    step = pl.program_id(0)

    xn = const_ref[0]
    yn = const_ref[1]
    s_r = const_ref[2]
    s_g = const_ref[3]
    s_b = const_ref[4]

    acc = jnp.zeros(xn.shape, jnp.float32)   # per-pixel residual, summed over B iters

    # TODO(synk): plain z-buffer with a per-face mean texture color instead of
    # neural_renderer's per-texel barycentric sampling + soft anti-aliasing
    # (exact for the module's default constant all-ones textures).
    for b in range(iters_per_step):          # static unroll over batched iterations
        base_it = (step * iters_per_step + b) * (n_faces * REC)

        zbuf = jnp.full(xn.shape, 1e30, jnp.float32)
        img_r = jnp.zeros(xn.shape, jnp.float32)   # background color 0 (renderer default)
        img_g = jnp.zeros(xn.shape, jnp.float32)
        img_b = jnp.zeros(xn.shape, jnp.float32)

        for f in range(n_faces):             # static unroll: n_faces is small (12)
            base = base_it + f * REC
            a0 = coef_ref[base + 0]; b0 = coef_ref[base + 1]; c0 = coef_ref[base + 2]
            a1 = coef_ref[base + 3]; b1 = coef_ref[base + 4]; c1 = coef_ref[base + 5]
            a2 = coef_ref[base + 6]; b2 = coef_ref[base + 7]; c2 = coef_ref[base + 8]
            pz = coef_ref[base + 9]; qz = coef_ref[base + 10]; rz = coef_ref[base + 11]
            cr = coef_ref[base + 12]; cg = coef_ref[base + 13]; cb = coef_ref[base + 14]

            # per-pixel vector work only: multiplies / adds / compares / selects
            w0 = a0 * yn + b0 * xn + c0
            w1 = a1 * yn + b1 * xn + c1
            w2 = a2 * yn + b2 * xn + c2
            inside = (w0 >= 0.0) & (w1 >= 0.0) & (w2 >= 0.0)
            z = pz * xn + qz * yn + rz
            hit = inside & (z > 0.0) & (z < zbuf)

            zbuf = jnp.where(hit, z, zbuf)
            img_r = jnp.where(hit, cr, img_r)
            img_g = jnp.where(hit, cg, img_g)
            img_b = jnp.where(hit, cb, img_b)

        d0 = img_r - s_r
        d1 = img_g - s_g
        d2 = img_b - s_b
        acc = acc + d0 * d0 + d1 * d1 + d2 * d2

    # lane-dense unmasked store of the per-pixel residual; reduced in the wrapper
    out_ref[...] = acc[None, :, :]


# ======================= hoisted per-(iter, face) setup =======================

def _prep_face_records(rot, eye, face_world, face_colors, inv_width):
    # rot (3,3), eye (3,), face_world (F,3,3), face_colors (F,3) -> (F,16)
    d = face_world - eye[None, None, :]               # (F,3,3)
    cam = jnp.einsum('ij,fvj->fvi', rot, d)           # camera-space vertices
    # TODO(synk): no near-plane clipping; clamp avoids inf for degenerate cameras
    # and is exact for CAM_DISTANCE >> mesh radius (cz always > 1 here).
    cz = jnp.maximum(cam[..., 2], 1e-5)
    xn = cam[..., 0] / cz * inv_width                 # (F,3) NDC x
    yn = cam[..., 1] / cz * inv_width                 # (F,3) NDC y
    zz = cam[..., 2]                                  # camera-space depth

    x0, x1, x2 = xn[:, 0], xn[:, 1], xn[:, 2]
    y0, y1, y2 = yn[:, 0], yn[:, 1], yn[:, 2]
    z0, z1, z2 = zz[:, 0], zz[:, 1], zz[:, 2]

    # edge functions w_k(xn, yn) = a_k*yn + b_k*xn + c_k
    a0 = x1 - x0; b0 = -(y1 - y0); c0 = (y1 - y0) * x0 - (x1 - x0) * y0
    a1 = x2 - x1; b1 = -(y2 - y1); c1 = (y2 - y1) * x1 - (x2 - x1) * y1
    a2 = x0 - x2; b2 = -(y0 - y2); c2 = (y0 - y2) * x2 - (x0 - x2) * y2

    area = (x1 - x0) * (y2 - y0) - (y1 - y0) * (x2 - x0)
    degen = jnp.abs(area) < 1e-8
    sgn = jnp.where(area >= 0.0, 1.0, -1.0)
    inv_abs_area = 1.0 / jnp.where(degen, 1.0, jnp.abs(area))

    # fold sign(area) into the coefficients -> inside test is all(w_k >= 0);
    # degenerate faces get (0, 0, -1) so they are never inside.
    def fold(a, b, c):
        return (jnp.where(degen, 0.0, sgn * a),
                jnp.where(degen, 0.0, sgn * b),
                jnp.where(degen, -1.0, sgn * c))
    a0, b0, c0 = fold(a0, b0, c0)
    a1, b1, c1 = fold(a1, b1, c1)
    a2, b2, c2 = fold(a2, b2, c2)

    # TODO(synk): depth interpolated linearly in NDC screen space (not
    # perspective-correct 1/z barycentric as in neural_renderer); benign for a
    # small convex mesh at CAM_DISTANCE >> radius.
    pz = jnp.where(degen, 0.0, (z0 * b1 + z1 * b2 + z2 * b0) * inv_abs_area)
    qz = jnp.where(degen, 0.0, (z0 * a1 + z1 * a2 + z2 * a0) * inv_abs_area)
    rz = jnp.where(degen, -1.0, (z0 * c1 + z1 * c2 + z2 * c0) * inv_abs_area)

    pad = jnp.zeros_like(z0)
    return jnp.stack(
        [a0, b0, c0, a1, b1, c1, a2, b2, c2, pz, qz, rz,
         face_colors[:, 0], face_colors[:, 1], face_colors[:, 2], pad],
        axis=1).astype(jnp.float32)                   # (F, 16)


def _choose_iters_per_step(iters):
    # Batch as many iterations per grid step as possible (amortize the ~0.35us
    # per-step overhead) while keeping grid length >= 2 so v7x megacore can
    # split the grid across both TensorCores.
    if iters <= 2:
        return 1
    for b in range(iters // 2, 0, -1):
        if iters % b == 0 and iters // b >= 2:
            return b
    return 1


def render_style_loss(rots, eyes, face_world, face_colors, style_chw):
    # rots: (iters,3,3), eyes: (iters,3), face_world: (F,3,3),
    # face_colors: (F,3), style_chw: (3,H,W)  ->  scalar loss summed over iters
    iters = rots.shape[0]
    n_faces = face_world.shape[0]
    H, W = style_chw.shape[1], style_chw.shape[2]
    n_pix = H * W
    assert n_pix % PIX_LANES == 0, "image must flatten to multiples of 128 pixels"
    rows = n_pix // PIX_LANES

    inv_width = 1.0 / math.tan(math.radians(VIEWING_ANGLE))

    # camera-independent per-pixel NDC maps (constants under jit), lane-dense,
    # merged with the style image into one resident VMEM block.
    p = jnp.arange(n_pix, dtype=jnp.int32)
    px = (p % W).astype(jnp.float32)
    py = (p // W).astype(jnp.float32)
    xn = (2.0 * (px + 0.5) / W - 1.0).reshape(rows, PIX_LANES)
    yn = (1.0 - 2.0 * (py + 0.5) / H).reshape(rows, PIX_LANES)
    consts = jnp.concatenate(
        [xn[None], yn[None], style_chw.reshape(3, rows, PIX_LANES)], axis=0)  # (5,rows,128)

    # hoisted per-(iteration, face) geometry setup (all the scalar divides and
    # ~100 scalar ops per face now live in vmapped JAX, not the kernel)
    records = jax.vmap(
        lambda rot, eye: _prep_face_records(rot, eye, face_world, face_colors, inv_width)
    )(rots, eyes)                                      # (iters, F, 16)
    records_flat = records.reshape(-1)                 # flat 1-D SMEM (no 2-D padding)

    iters_per_step = _choose_iters_per_step(iters)
    grid_len = iters // iters_per_step

    kernel = functools.partial(fused_render_loss_kernel,
                               n_faces=n_faces, iters_per_step=iters_per_step)
    out = pl.pallas_call(
        kernel,
        out_shape=jax.ShapeDtypeStruct((grid_len, rows, PIX_LANES), jnp.float32),
        grid=(grid_len,),
        in_specs=[
            pl.BlockSpec(memory_space=pltpu.MemorySpace.SMEM),        # per-(iter,face) records
            pl.BlockSpec((5, rows, PIX_LANES), lambda i: (0, 0, 0)),  # xn/yn/style (resident)
        ],
        out_specs=pl.BlockSpec((1, rows, PIX_LANES), lambda i: (i, 0, 0)),
        compiler_params=pltpu.CompilerParams(
            dimension_semantics=("parallel",)),  # iteration batches shard across v7x cores
    )(records_flat, consts)
    # final reduction over pixels and iterations in the wrapper (no in-kernel XLU)
    return jnp.sum(out)


# ================================ glue (JAX) =================================

def normalize_vertices(v):
    v = v - v.min(axis=0, keepdims=True)
    v = v / jnp.abs(v).max()
    v = v * 2.0
    v = v - v.max(axis=0, keepdims=True) / 2.0
    return v


def get_points_from_angles(distance, elevation, azimuth):
    elevation = jnp.deg2rad(elevation)
    azimuth = jnp.deg2rad(azimuth)
    return jnp.stack([
        distance * jnp.cos(elevation) * jnp.sin(azimuth),
        distance * jnp.sin(elevation),
        -distance * jnp.cos(elevation) * jnp.cos(azimuth),
    ]).astype(jnp.float32)


def look_at_rotation(eye):
    at = jnp.zeros(3, jnp.float32)
    up = jnp.array([0.0, 1.0, 0.0], jnp.float32)
    z = at - eye
    z = z / (jnp.linalg.norm(z) + 1e-8)
    x = jnp.cross(up, z)
    x = x / (jnp.linalg.norm(x) + 1e-8)
    y = jnp.cross(z, x)
    y = y / (jnp.linalg.norm(y) + 1e-8)
    return jnp.stack([x, y, z], axis=0).astype(jnp.float32)  # rows = camera axes


@jax.jit
def mesh_renderer_forward(face_world, textures, style, azimuths, elevations,
                          camera_distance):
    # face colors are camera-independent -> computed once per forward
    # (plain JAX: 2.3K tanh is far smaller than a kernel launch)
    face_colors = AMBIENT * jnp.mean(jnp.tanh(textures[0]), axis=(1, 2, 3))  # (F,3)
    eyes = jax.vmap(
        lambda a, e: get_points_from_angles(camera_distance, e, a)
    )(azimuths, elevations)                                                  # (iters,3)
    rots = jax.vmap(look_at_rotation)(eyes)                                  # (iters,3,3)
    return render_style_loss(rots, eyes, face_world, face_colors, style[0])


class MeshRendererModel:
    def __init__(self, vertices, faces, style, textures_=None,
                 texture_size=TEXTURE_SIZE, camera_distance=CAM_DISTANCE):
        self.vertices = normalize_vertices(vertices)[None]    # (1, V, 3)
        self.faces = faces[None]                               # (1, F, 3)
        self.style = style                                     # (1, 3, H, W)
        self.camera_distance = camera_distance
        F = faces.shape[0]
        if textures_ is not None:
            self.textures = textures_
        else:
            # nn.Parameter default: all-ones texture cube
            self.textures = jnp.ones(
                (1, F, texture_size, texture_size, texture_size, 3), jnp.float32)
        # camera-independent face-vertex gather, hoisted out of the render loop
        self.face_world = self.vertices[0][self.faces[0]]      # (F, 3, 3)

    def forward(self, azimuths, elevations):
        # torch forward(iters) draws np.random camera angles per iteration;
        # here they are precomputed deterministically and passed in.
        return mesh_renderer_forward(self.face_world, self.textures, self.style,
                                     azimuths, elevations, self.camera_distance)


if __name__ == "__main__":
    key = jax.random.PRNGKey(0)
    k_style, k_az, k_el = jax.random.split(key, 3)

    # Small deterministic mesh: a unit cube (8 vertices, 12 triangular faces).
    vertices = jnp.array(
        [[x, y, z] for x in (0.0, 1.0) for y in (0.0, 1.0) for z in (0.0, 1.0)],
        jnp.float32)
    faces = jnp.array([
        [0, 1, 3], [0, 3, 2],
        [4, 6, 7], [4, 7, 5],
        [0, 4, 5], [0, 5, 1],
        [2, 3, 7], [2, 7, 6],
        [0, 2, 6], [0, 6, 4],
        [1, 5, 7], [1, 7, 3],
    ], jnp.int32)

    style = jax.random.uniform(k_style, (1, 3, IMSIZE, IMSIZE), jnp.float32)

    model = MeshRendererModel(vertices, faces, style)

    iters = 2
    azimuths = jax.random.uniform(k_az, (iters,), minval=0.0, maxval=360.0)
    elevations = jax.random.uniform(k_el, (iters,), minval=-100.0, maxval=100.0)

    total_loss = model.forward(azimuths, elevations)
    total_loss = jax.block_until_ready(total_loss)
    assert jnp.isfinite(total_loss), "loss is not finite"
    print("KERNEL_OK")
</pallas_src>

<mosaic_0001>
module attributes {stable_mosaic.version = 11 : i64} {
  func.func @fused_render_loss_kernel(%arg0: i32, %arg1: memref<384xf32, #tpu.memory_space<smem>>, %arg2: memref<5x8x128xf32, #tpu.memory_space<vmem>>, %arg3: memref<1x8x128xf32, #tpu.memory_space<vmem>>) attributes {dimension_semantics = [#tpu.dimension_semantics<parallel>], iteration_bounds = array<i64: 2>, scalar_prefetch = 0 : i64, scratch_operands = 0 : i64, tpu.core_type = #tpu.core_type<tc>, window_params = [{transform_indices = @transform_0, window_bounds = array<i64: 384>}, {pipeline_mode = #tpu.pipeline_mode<synchronous>, transform_indices = @transform_1, window_bounds = array<i64: 5, 8, 128>}, {transform_indices = @transform_2, window_bounds = array<i64: 1, 8, 128>}]} {
    %c0 = arith.constant 0 : index
    %c0_0 = arith.constant 0 : index
    %c0_1 = arith.constant 0 : index
    %0 = vector.load %arg2[%c0, %c0_0, %c0_1] : memref<5x8x128xf32, #tpu.memory_space<vmem>>, vector<1x8x128xf32>
    %1 = vector.shape_cast %0 : vector<1x8x128xf32> to vector<8x128xf32>
    %c1 = arith.constant 1 : index
    %c0_2 = arith.constant 0 : index
    %c0_3 = arith.constant 0 : index
    %2 = vector.load %arg2[%c1, %c0_2, %c0_3] : memref<5x8x128xf32, #tpu.memory_space<vmem>>, vector<1x8x128xf32>
    %3 = vector.shape_cast %2 : vector<1x8x128xf32> to vector<8x128xf32>
    %c2 = arith.constant 2 : index
    %c0_4 = arith.constant 0 : index
    %c0_5 = arith.constant 0 : index
    %4 = vector.load %arg2[%c2, %c0_4, %c0_5] : memref<5x8x128xf32, #tpu.memory_space<vmem>>, vector<1x8x128xf32>
    %5 = vector.shape_cast %4 : vector<1x8x128xf32> to vector<8x128xf32>
    %c3 = arith.constant 3 : index
    %c0_6 = arith.constant 0 : index
    %c0_7 = arith.constant 0 : index
    %6 = vector.load %arg2[%c3, %c0_6, %c0_7] : memref<5x8x128xf32, #tpu.memory_space<vmem>>, vector<1x8x128xf32>
    %7 = vector.shape_cast %6 : vector<1x8x128xf32> to vector<8x128xf32>
    %c4 = arith.constant 4 : index
    %c0_8 = arith.constant 0 : index
    %c0_9 = arith.constant 0 : index
    %8 = vector.load %arg2[%c4, %c0_8, %c0_9] : memref<5x8x128xf32, #tpu.memory_space<vmem>>, vector<1x8x128xf32>
    %9 = vector.shape_cast %8 : vector<1x8x128xf32> to vector<8x128xf32>
    %cst = arith.constant 0.000000e+00 : f32
    %10 = vector.broadcast %cst : f32 to vector<8x128xf32>
    %c1_i32 = arith.constant 1 : i32
    %11 = arith.muli %arg0, %c1_i32 : i32
    %c0_i32 = arith.constant 0 : i32
    %12 = arith.addi %11, %c0_i32 : i32
    %c192_i32 = arith.constant 192 : i32
    %13 = arith.muli %12, %c192_i32 : i32
    %cst_10 = arith.constant 1.000000e+30 : f32
    %14 = vector.broadcast %cst_10 : f32 to vector<8x128xf32>
    %cst_11 = arith.constant 0.000000e+00 : f32
    %15 = vector.broadcast %cst_11 : f32 to vector<8x128xf32>
    %cst_12 = arith.constant 0.000000e+00 : f32
    %16 = vector.broadcast %cst_12 : f32 to vector<8x128xf32>
    %cst_13 = arith.constant 0.000000e+00 : f32
    %17 = vector.broadcast %cst_13 : f32 to vector<8x128xf32>
    %c0_i32_14 = arith.constant 0 : i32
    %18 = arith.addi %13, %c0_i32_14 : i32
    %c0_i32_15 = arith.constant 0 : i32
    %19 = arith.addi %18, %c0_i32_15 : i32
    %20 = arith.index_cast %19 : i32 to index
    %21 = memref.load %arg1[%20] : memref<384xf32, #tpu.memory_space<smem>>
    %c1_i32_16 = arith.constant 1 : i32
    %22 = arith.addi %18, %c1_i32_16 : i32
    %23 = arith.index_cast %22 : i32 to index
    %24 = memref.load %arg1[%23] : memref<384xf32, #tpu.memory_space<smem>>
    %c2_i32 = arith.constant 2 : i32
    %25 = arith.addi %18, %c2_i32 : i32
    %26 = arith.index_cast %25 : i32 to index
    %27 = memref.load %arg1[%26] : memref<384xf32, #tpu.memory_space<smem>>
    %c3_i32 = arith.constant 3 : i32
    %28 = arith.addi %18, %c3_i32 : i32
    %29 = arith.index_cast %28 : i32 to index
    %30 = memref.load %arg1[%29] : memref<384xf32, #tpu.memory_space<smem>>
    %c4_i32 = arith.constant 4 : i32
    %31 = arith.addi %18, %c4_i32 : i32
    %32 = arith.index_cast %31 : i32 to index
    %33 = memref.load %arg1[%32] : memref<384xf32, #tpu.memory_space<smem>>
    %c5_i32 = arith.constant 5 : i32
    %34 = arith.addi %18, %c5_i32 : i32
    %35 = arith.index_cast %34 : i32 to index
    %36 = memref.load %arg1[%35] : memref<384xf32, #tpu.memory_space<smem>>
    %c6_i32 = arith.constant 6 : i32
    %37 = arith.addi %18, %c6_i32 : i32
    %38 = arith.index_cast %37 : i32 to index
    %39 = memref.load %arg1[%38] : memref<384xf32, #tpu.memory_space<smem>>
    %c7_i32 = arith.constant 7 : i32
    %40 = arith.addi %18, %c7_i32 : i32
    %41 = arith.index_cast %40 : i32 to index
    %42 = memref.load %arg1[%41] : memref<384xf32, #tpu.memory_space<smem>>
    %c8_i32 = arith.constant 8 : i32
    %43 = arith.addi %18, %c8_i32 : i32
    %44 = arith.index_cast %43 : i32 to index
    %45 = memref.load %arg1[%44] : memref<384xf32, #tpu.memory_space<smem>>
    %c9_i32 = arith.constant 9 : i32
    %46 = arith.addi %18, %c9_i32 : i32
    %47 = arith.index_cast %46 : i32 to index
    %48 = memref.load %arg1[%47] : memref<384xf32, #tpu.memory_space<smem>>
    %c10_i32 = arith.constant 10 : i32
    %49 = arith.addi %18, %c10_i32 : i32
    %50 = arith.index_cast %49 : i32 to index
    %51 = memref.load %arg1[%50] : memref<384xf32, #tpu.memory_space<smem>>
    %c11_i32 = arith.constant 11 : i32
    %52 = arith.addi %18, %c11_i32 : i32
    %53 = arith.index_cast %52 : i32 to index
    %54 = memref.load %arg1[%53] : memref<384xf32, #tpu.memory_space<smem>>
    %c12_i32 = arith.constant 12 : i32
    %55 = arith.addi %18, %c12_i32 : i32
    %56 = arith.index_cast %55 : i32 to index
    %57 = memref.load %arg1[%56] : memref<384xf32, #tpu.memory_space<smem>>
    %c13_i32 = arith.constant 13 : i32
    %58 = arith.addi %18, %c13_i32 : i32
    %59 = arith.index_cast %58 : i32 to index
    %60 = memref.load %arg1[%59] : memref<384xf32, #tpu.memory_space<smem>>
    %c14_i32 = arith.constant 14 : i32
    %61 = arith.addi %18, %c14_i32 : i32
    %62 = arith.index_cast %61 : i32 to index
    %63 = memref.load %arg1[%62] : memref<384xf32, #tpu.memory_space<smem>>
    %64 = vector.broadcast %21 : f32 to vector<8x128xf32>
    %65 = arith.mulf %64, %3 : vector<8x128xf32>
    %66 = vector.broadcast %24 : f32 to vector<8x128xf32>
    %67 = arith.mulf %66, %1 : vector<8x128xf32>
    %68 = arith.addf %65, %67 : vector<8x128xf32>
    %69 = vector.broadcast %27 : f32 to vector<8x128xf32>
    %70 = arith.addf %68, %69 : vector<8x128xf32>
    %71 = vector.broadcast %30 : f32 to vector<8x128xf32>
    %72 = arith.mulf %71, %3 : vector<8x128xf32>
    %73 = vector.broadcast %33 : f32 to vector<8x128xf32>
    %74 = arith.mulf %73, %1 : vector<8x128xf32>
    %75 = arith.addf %72, %74 : vector<8x128xf32>
    %76 = vector.broadcast %36 : f32 to vector<8x128xf32>
    %77 = arith.addf %75, %76 : vector<8x128xf32>
    %78 = vector.broadcast %39 : f32 to vector<8x128xf32>
    %79 = arith.mulf %78, %3 : vector<8x128xf32>
    %80 = vector.broadcast %42 : f32 to vector<8x128xf32>
    %81 = arith.mulf %80, %1 : vector<8x128xf32>
    %82 = arith.addf %79, %81 : vector<8x128xf32>
    %83 = vector.broadcast %45 : f32 to vector<8x128xf32>
    %84 = arith.addf %82, %83 : vector<8x128xf32>
    %cst_17 = arith.constant 0.000000e+00 : f32
    %85 = vector.broadcast %cst_17 : f32 to vector<8x128xf32>
    %86 = arith.cmpf oge, %70, %85 : vector<8x128xf32>
    %cst_18 = arith.constant 0.000000e+00 : f32
    %87 = vector.broadcast %cst_18 : f32 to vector<8x128xf32>
    %88 = arith.cmpf oge, %77, %87 : vector<8x128xf32>
    %89 = arith.andi %86, %88 : vector<8x128xi1>
    %cst_19 = arith.constant 0.000000e+00 : f32
    %90 = vector.broadcast %cst_19 : f32 to vector<8x128xf32>
    %91 = arith.cmpf oge, %84, %90 : vector<8x128xf32>
    %92 = arith.andi %89, %91 : vector<8x128xi1>
    %93 = vector.broadcast %48 : f32 to vector<8x128xf32>
    %94 = arith.mulf %93, %1 : vector<8x128xf32>
    %95 = vector.broadcast %51 : f32 to vector<8x128xf32>
    %96 = arith.mulf %95, %3 : vector<8x128xf32>
    %97 = arith.addf %94, %96 : vector<8x128xf32>
    %98 = vector.broadcast %54 : f32 to vector<8x128xf32>
    %99 = arith.addf %97, %98 : vector<8x128xf32>
    %cst_20 = arith.constant 0.000000e+00 : f32
    %100 = vector.broadcast %cst_20 : f32 to vector<8x128xf32>
    %101 = arith.cmpf ogt, %99, %100 : vector<8x128xf32>
    %102 = arith.andi %92, %101 : vector<8x128xi1>
    %103 = arith.cmpf olt, %99, %14 : vector<8x128xf32>
    %104 = arith.andi %102, %103 : vector<8x128xi1>
    %105 = arith.select %104, %99, %14 : vector<8x128xi1>, vector<8x128xf32>
    %106 = vector.broadcast %57 : f32 to vector<8x128xf32>
    %107 = arith.select %104, %106, %15 : vector<8x128xi1>, vector<8x128xf32>
    %108 = vector.broadcast %60 : f32 to vector<8x128xf32>
    %109 = arith.select %104, %108, %16 : vector<8x128xi1>, vector<8x128xf32>
    %110 = vector.broadcast %63 : f32 to vector<8x128xf32>
    %111 = arith.select %104, %110, %17 : vector<8x128xi1>, vector<8x128xf32>
    %c16_i32 = arith.constant 16 : i32
    %112 = arith.addi %13, %c16_i32 : i32
    %c0_i32_21 = arith.constant 0 : i32
    %113 = arith.addi %112, %c0_i32_21 : i32
    %114 = arith.index_cast %113 : i32 to index
    %115 = memref.load %arg1[%114] : memref<384xf32, #tpu.memory_space<smem>>
    %c1_i32_22 = arith.constant 1 : i32
    %116 = arith.addi %112, %c1_i32_22 : i32
    %117 = arith.index_cast %116 : i32 to index
    %118 = memref.load %arg1[%117] : memref<384xf32, #tpu.memory_space<smem>>
    %c2_i32_23 = arith.constant 2 : i32
    %119 = arith.addi %112, %c2_i32_23 : i32
    %120 = arith.index_cast %119 : i32 to index
    %121 = memref.load %arg1[%120] : memref<384xf32, #tpu.memory_space<smem>>
    %c3_i32_24 = arith.constant 3 : i32
    %122 = arith.addi %112, %c3_i32_24 : i32
    %123 = arith.index_cast %122 : i32 to index
    %124 = memref.load %arg1[%123] : memref<384xf32, #tpu.memory_space<smem>>
    %c4_i32_25 = arith.constant 4 : i32
    %125 = arith.addi %112, %c4_i32_25 : i32
    %126 = arith.index_cast %125 : i32 to index
    %127 = memref.load %arg1[%126] : memref<384xf32, #tpu.memory_space<smem>>
    %c5_i32_26 = arith.constant 5 : i32
    %128 = arith.addi %112, %c5_i32_26 : i32
    %129 = arith.index_cast %128 : i32 to index
    %130 = memref.load %arg1[%129] : memref<384xf32, #tpu.memory_space<smem>>
    %c6_i32_27 = arith.constant 6 : i32
    %131 = arith.addi %112, %c6_i32_27 : i32
    %132 = arith.index_cast %131 : i32 to index
    %133 = memref.load %arg1[%132] : memref<384xf32, #tpu.memory_space<smem>>
    %c7_i32_28 = arith.constant 7 : i32
    %134 = arith.addi %112, %c7_i32_28 : i32
    %135 = arith.index_cast %134 : i32 to index
    %136 = memref.load %arg1[%135] : memref<384xf32, #tpu.memory_space<smem>>
    %c8_i32_29 = arith.constant 8 : i32
    %137 = arith.addi %112, %c8_i32_29 : i32
    %138 = arith.index_cast %137 : i32 to index
    %139 = memref.load %arg1[%138] : memref<384xf32, #tpu.memory_space<smem>>
    %c9_i32_30 = arith.constant 9 : i32
    %140 = arith.addi %112, %c9_i32_30 : i32
    %141 = arith.index_cast %140 : i32 to index
    %142 = memref.load %arg1[%141] : memref<384xf32, #tpu.memory_space<smem>>
    %c10_i32_31 = arith.constant 10 : i32
    %143 = arith.addi %112, %c10_i32_31 : i32
    %144 = arith.index_cast %143 : i32 to index
    %145 = memref.load %arg1[%144] : memref<384xf32, #tpu.memory_space<smem>>
    %c11_i32_32 = arith.constant 11 : i32
    %146 = arith.addi %112, %c11_i32_32 : i32
    %147 = arith.index_cast %146 : i32 to index
    %148 = memref.load %arg1[%147] : memref<384xf32, #tpu.memory_space<smem>>
    %c12_i32_33 = arith.constant 12 : i32
    %149 = arith.addi %112, %c12_i32_33 : i32
    %150 = arith.index_cast %149 : i32 to index
    %151 = memref.load %arg1[%150] : memref<384xf32, #tpu.memory_space<smem>>
    %c13_i32_34 = arith.constant 13 : i32
    %152 = arith.addi %112, %c13_i32_34 : i32
    %153 = arith.index_cast %152 : i32 to index
    %154 = memref.load %arg1[%153] : memref<384xf32, #tpu.memory_space<smem>>
    %c14_i32_35 = arith.constant 14 : i32
    %155 = arith.addi %112, %c14_i32_35 : i32
    %156 = arith.index_cast %155 : i32 to index
    %157 = memref.load %arg1[%156] : memref<384xf32, #tpu.memory_space<smem>>
    %158 = vector.broadcast %115 : f32 to vector<8x128xf32>
    %159 = arith.mulf %158, %3 : vector<8x128xf32>
    %160 = vector.broadcast %118 : f32 to vector<8x128xf32>
    %161 = arith.mulf %160, %1 : vector<8x128xf32>
    %162 = arith.addf %159, %161 : vector<8x128xf32>
    %163 = vector.broadcast %121 : f32 to vector<8x128xf32>
    %164 = arith.addf %162, %163 : vector<8x128xf32>
    %165 = vector.broadcast %124 : f32 to vector<8x128xf32>
    %166 = arith.mulf %165, %3 : vector<8x128xf32>
    %167 = vector.broadcast %127 : f32 to vector<8x128xf32>
    %168 = arith.mulf %167, %1 : vector<8x128xf32>
    %169 = arith.addf %166, %168 : vector<8x128xf32>
    %170 = vector.broadcast %130 : f32 to vector<8x128xf32>
    %171 = arith.addf %169, %170 : vector<8x128xf32>
    %172 = vector.broadcast %133 : f32 to vector<8x128xf32>
    %173 = arith.mulf %172, %3 : vector<8x128xf32>
    %174 = vector.broadcast %136 : f32 to vector<8x128xf32>
    %175 = arith.mulf %174, %1 : vector<8x128xf32>
    %176 = arith.addf %173, %175 : vector<8x128xf32>
    %177 = vector.broadcast %139 : f32 to vector<8x128xf32>
    %178 = arith.addf %176, %177 : vector<8x128xf32>
    %cst_36 = arith.constant 0.000000e+00 : f32
    %179 = vector.broadcast %cst_36 : f32 to vector<8x128xf32>
    %180 = arith.cmpf oge, %164, %179 : vector<8x128xf32>
    %cst_37 = arith.constant 0.000000e+00 : f32
    %181 = vector.broadcast %cst_37 : f32 to vector<8x128xf32>
    %182 = arith.cmpf oge, %171, %181 : vector<8x128xf32>
    %183 = arith.andi %180, %182 : vector<8x128xi1>
    %cst_38 = arith.constant 0.000000e+00 : f32
    %184 = vector.broadcast %cst_38 : f32 to vector<8x128xf32>
    %185 = arith.cmpf oge, %178, %184 : vector<8x128xf32>
    %186 = arith.andi %183, %185 : vector<8x128xi1>
    %187 = vector.broadcast %142 : f32 to vector<8x128xf32>
    %188 = arith.mulf %187, %1 : vector<8x128xf32>
    %189 = vector.broadcast %145 : f32 to vector<8x128xf32>
    %190 = arith.mulf %189, %3 : vector<8x128xf32>
    %191 = arith.addf %188, %190 : vector<8x128xf32>
    %192 = vector.broadcast %148 : f32 to vector<8x128xf32>
    %193 = arith.addf %191, %192 : vector<8x128xf32>
    %cst_39 = arith.constant 0.000000e+00 : f32
    %194 = vector.broadcast %cst_39 : f32 to vector<8x128xf32>
    %195 = arith.cmpf ogt, %193, %194 : vector<8x128xf32>
    %196 = arith.andi %186, %195 : vector<8x128xi1>
    %197 = arith.cmpf olt, %193, %105 : vector<8x128xf32>
    %198 = arith.andi %196, %197 : vector<8x128xi1>
    %199 = arith.select %198, %193, %105 : vector<8x128xi1>, vector<8x128xf32>
    %200 = vector.broadcast %151 : f32 to vector<8x128xf32>
    %201 = arith.select %198, %200, %107 : vector<8x128xi1>, vector<8x128xf32>
    %202 = vector.broadcast %154 : f32 to vector<8x128xf32>
    %203 = arith.select %198, %202, %109 : vector<8x128xi1>, vector<8x128xf32>
    %204 = vector.broadcast %157 : f32 to vector<8x128xf32>
    %205 = arith.select %198, %204, %111 : vector<8x128xi1>, vector<8x128xf32>
    %c32_i32 = arith.constant 32 : i32
    %206 = arith.addi %13, %c32_i32 : i32
    %c0_i32_40 = arith.constant 0 : i32
    %207 = arith.addi %206, %c0_i32_40 : i32
    %208 = arith.index_cast %207 : i32 to index
    %209 = memref.load %arg1[%208] : memref<384xf32, #tpu.memory_space<smem>>
    %c1_i32_41 = arith.constant 1 : i32
    %210 = arith.addi %206, %c1_i32_41 : i32
    %211 = arith.index_cast %210 : i32 to index
    %212 = memref.load %arg1[%211] : memref<384xf32, #tpu.memory_space<smem>>
    %c2_i32_42 = arith.constant 2 : i32
    %213 = arith.addi %206, %c2_i32_42 : i32
    %214 = arith.index_cast %213 : i32 to index
    %215 = memref.load %arg1[%214] : memref<384xf32, #tpu.memory_space<smem>>
    %c3_i32_43 = arith.constant 3 : i32
    %216 = arith.addi %206, %c3_i32_43 : i32
    %217 = arith.index_cast %216 : i32 to index
    %218 = memref.load %arg1[%217] : memref<384xf32, #tpu.memory_space<smem>>
    %c4_i32_44 = arith.constant 4 : i32
    %219 = arith.addi %206, %c4_i32_44 : i32
    %220 = arith.index_cast %219 : i32 to index
    %221 = memref.load %arg1[%220] : memref<384xf32, #tpu.memory_space<smem>>
    %c5_i32_45 = arith.constant 5 : i32
    %222 = arith.addi %206, %c5_i32_45 : i32
    %223 = arith.index_cast %222 : i32 to index
    %224 = memref.load %arg1[%223] : memref<384xf32, #tpu.memory_space<smem>>
    %c6_i32_46 = arith.constant 6 : i32
    %225 = arith.addi %206, %c6_i32_46 : i32
    %226 = arith.index_cast %225 : i32 to index
    %227 = memref.load %arg1[%226] : memref<384xf32, #tpu.memory_space<smem>>
    %c7_i32_47 = arith.constant 7 : i32
    %228 = arith.addi %206, %c7_i32_47 : i32
    %229 = arith.index_cast %228 : i32 to index
    %230 = memref.load %arg1[%229] : memref<384xf32, #tpu.memory_space<smem>>
    %c8_i32_48 = arith.constant 8 : i32
    %231 = arith.addi %206, %c8_i32_48 : i32
    %232 = arith.index_cast %231 : i32 to index
    %233 = memref.load %arg1[%232] : memref<384xf32, #tpu.memory_space<smem>>
    %c9_i32_49 = arith.constant 9 : i32
    %234 = arith.addi %206, %c9_i32_49 : i32
    %235 = arith.index_cast %234 : i32 to index
    %236 = memref.load %arg1[%235] : memref<384xf32, #tpu.memory_space<smem>>
    %c10_i32_50 = arith.constant 10 : i32
    %237 = arith.addi %206, %c10_i32_50 : i32
    %238 = arith.index_cast %237 : i32 to index
    %239 = memref.load %arg1[%238] : memref<384xf32, #tpu.memory_space<smem>>
    %c11_i32_51 = arith.constant 11 : i32
    %240 = arith.addi %206, %c11_i32_51 : i32
    %241 = arith.index_cast %240 : i32 to index
    %242 = memref.load %arg1[%241] : memref<384xf32, #tpu.memory_space<smem>>
    %c12_i32_52 = arith.constant 12 : i32
    %243 = arith.addi %206, %c12_i32_52 : i32
    %244 = arith.index_cast %243 : i32 to index
    %245 = memref.load %arg1[%244] : memref<384xf32, #tpu.memory_space<smem>>
    %c13_i32_53 = arith.constant 13 : i32
    %246 = arith.addi %206, %c13_i32_53 : i32
    %247 = arith.index_cast %246 : i32 to index
    %248 = memref.load %arg1[%247] : memref<384xf32, #tpu.memory_space<smem>>
    %c14_i32_54 = arith.constant 14 : i32
    %249 = arith.addi %206, %c14_i32_54 : i32
    %250 = arith.index_cast %249 : i32 to index
    %251 = memref.load %arg1[%250] : memref<384xf32, #tpu.memory_space<smem>>
    %252 = vector.broadcast %209 : f32 to vector<8x128xf32>
    %253 = arith.mulf %252, %3 : vector<8x128xf32>
    %254 = vector.broadcast %212 : f32 to vector<8x128xf32>
    %255 = arith.mulf %254, %1 : vector<8x128xf32>
    %256 = arith.addf %253, %255 : vector<8x128xf32>
    %257 = vector.broadcast %215 : f32 to vector<8x128xf32>
    %258 = arith.addf %256, %257 : vector<8x128xf32>
    %259 = vector.broadcast %218 : f32 to vector<8x128xf32>
    %260 = arith.mulf %259, %3 : vector<8x128xf32>
    %261 = vector.broadcast %221 : f32 to vector<8x128xf32>
    %262 = arith.mulf %261, %1 : vector<8x128xf32>
    %263 = arith.addf %260, %262 : vector<8x128xf32>
    %264 = vector.broadcast %224 : f32 to vector<8x128xf32>
    %265 = arith.addf %263, %264 : vector<8x128xf32>
    %266 = vector.broadcast %227 : f32 to vector<8x128xf32>
    %267 = arith.mulf %266, %3 : vector<8x128xf32>
    %268 = vector.broadcast %230 : f32 to vector<8x128xf32>
    %269 = arith.mulf %268, %1 : vector<8x128xf32>
    %270 = arith.addf %267, %269 : vector<8x128xf32>
    %271 = vector.broadcast %233 : f32 to vector<8x128xf32>
    %272 = arith.addf %270, %271 : vector<8x128xf32>
    %cst_55 = arith.constant 0.000000e+00 : f32
    %273 = vector.broadcast %cst_55 : f32 to vector<8x128xf32>
    %274 = arith.cmpf oge, %258, %273 : vector<8x128xf32>
    %cst_56 = arith.constant 0.000000e+00 : f32
    %275 = vector.broadcast %cst_56 : f32 to vector<8x128xf32>
    %276 = arith.cmpf oge, %265, %275 : vector<8x128xf32>
    %277 = arith.andi %274, %276 : vector<8x128xi1>
    %cst_57 = arith.constant 0.000000e+00 : f32
    %278 = vector.broadcast %cst_57 : f32 to vector<8x128xf32>
    %279 = arith.cmpf oge, %272, %278 : vector<8x128xf32>
    %280 = arith.andi %277, %279 : vector<8x128xi1>
    %281 = vector.broadcast %236 : f32 to vector<8x128xf32>
    %282 = arith.mulf %281, %1 : vector<8x128xf32>
    %283 = vector.broadcast %239 : f32 to vector<8x128xf32>
    %284 = arith.mulf %283, %3 : vector<8x128xf32>
    %285 = arith.addf %282, %284 : vector<8x128xf32>
    %286 = vector.broadcast %242 : f32 to vector<8x128xf32>
    %287 = arith.addf %285, %286 : vector<8x128xf32>
    %cst_58 = arith.constant 0.000000e+00 : f32
    %288 = vector.broadcast %cst_58 : f32 to vector<8x128xf32>
    %289 = arith.cmpf ogt, %287, %288 : vector<8x128xf32>
    %290 = arith.andi %280, %289 : vector<8x128xi1>
    %291 = arith.cmpf olt, %287, %199 : vector<8x128xf32>
    %292 = arith.andi %290, %291 : vector<8x128xi1>
    %293 = arith.select %292, %287, %199 : vector<8x128xi1>, vector<8x128xf32>
    %294 = vector.broadcast %245 : f32 to vector<8x128xf32>
    %295 = arith.select %292, %294, %201 : vector<8x128xi1>, vector<8x128xf32>
    %296 = vector.broadcast %248 : f32 to vector<8x128xf32>
    %297 = arith.select %292, %296, %203 : vector<8x128xi1>, vector<8x128xf32>
    %298 = vector.broadcast %251 : f32 to vector<8x128xf32>
    %299 = arith.select %292, %298, %205 : vector<8x128xi1>, vector<8x128xf32>
    %c48_i32 = arith.constant 48 : i32
    %300 = arith.addi %13, %c48_i32 : i32
    %c0_i32_59 = arith.constant 0 : i32
    %301 = arith.addi %300, %c0_i32_59 : i32
    %302 = arith.index_cast %301 : i32 to index
    %303 = memref.load %arg1[%302] : memref<384xf32, #tpu.memory_space<smem>>
    %c1_i32_60 = arith.constant 1 : i32
    %304 = arith.addi %300, %c1_i32_60 : i32
    %305 = arith.index_cast %304 : i32 to index
    %306 = memref.load %arg1[%305] : memref<384xf32, #tpu.memory_space<smem>>
    %c2_i32_61 = arith.constant 2 : i32
    %307 = arith.addi %300, %c2_i32_61 : i32
    %308 = arith.index_cast %307 : i32 to index
    %309 = memref.load %arg1[%308] : memref<384xf32, #tpu.memory_space<smem>>
    %c3_i32_62 = arith.constant 3 : i32
    %310 = arith.addi %300, %c3_i32_62 : i32
    %311 = arith.index_cast %310 : i32 to index
    %312 = memref.load %arg1[%311] : memref<384xf32, #tpu.memory_space<smem>>
    %c4_i32_63 = arith.constant 4 : i32
    %313 = arith.addi %300, %c4_i32_63 : i32
    %314 = arith.index_cast %313 : i32 to index
    %315 = memref.load %arg1[%314] : memref<384xf32, #tpu.memory_space<smem>>
    %c5_i32_64 = arith.constant 5 : i32
    %316 = arith.addi %300, %c5_i32_64 : i32
    %317 = arith.index_cast %316 : i32 to index
    %318 = memref.load %arg1[%317] : memref<384xf32, #tpu.memory_space<smem>>
    %c6_i32_65 = arith.constant 6 : i32
    %319 = arith.addi %300, %c6_i32_65 : i32
    %320 = arith.index_cast %319 : i32 to index
    %321 = memref.load %arg1[%320] : memref<384xf32, #tpu.memory_space<smem>>
    %c7_i32_66 = arith.constant 7 : i32
    %322 = arith.addi %300, %c7_i32_66 : i32
    %323 = arith.index_cast %322 : i32 to index
    %324 = memref.load %arg1[%323] : memref<384xf32, #tpu.memory_space<smem>>
    %c8_i32_67 = arith.constant 8 : i32
    %325 = arith.addi %300, %c8_i32_67 : i32
    %326 = arith.index_cast %325 : i32 to index
    %327 = memref.load %arg1[%326] : memref<384xf32, #tpu.memory_space<smem>>
    %c9_i32_68 = arith.constant 9 : i32
    %328 = arith.addi %300, %c9_i32_68 : i32
    %329 = arith.index_cast %328 : i32 to index
    %330 = memref.load %arg1[%329] : memref<384xf32, #tpu.memory_space<smem>>
    %c10_i32_69 = arith.constant 10 : i32
    %331 = arith.addi %300, %c10_i32_69 : i32
    %332 = arith.index_cast %331 : i32 to index
    %333 = memref.load %arg1[%332] : memref<384xf32, #tpu.memory_space<smem>>
    %c11_i32_70 = arith.constant 11 : i32
    %334 = arith.addi %300, %c11_i32_70 : i32
    %335 = arith.index_cast %334 : i32 to index
    %336 = memref.load %arg1[%335] : memref<384xf32, #tpu.memory_space<smem>>
    %c12_i32_71 = arith.constant 12 : i32
    %337 = arith.addi %300, %c12_i32_71 : i32
    %338 = arith.index_cast %337 : i32 to index
    %339 = memref.load %arg1[%338] : memref<384xf32, #tpu.memory_space<smem>>
    %c13_i32_72 = arith.constant 13 : i32
    %340 = arith.addi %300, %c13_i32_72 : i32
    %341 = arith.index_cast %340 : i32 to index
    %342 = memref.load %arg1[%341] : memref<384xf32, #tpu.memory_space<smem>>
    %c14_i32_73 = arith.constant 14 : i32
    %343 = arith.addi %300, %c14_i32_73 : i32
    %344 = arith.index_cast %343 : i32 to index
    %345 = memref.load %arg1[%344] : memref<384xf32, #tpu.memory_space<smem>>
    %346 = vector.broadcast %303 : f32 to vector<8x128xf32>
    %347 = arith.mulf %346, %3 : vector<8x128xf32>
    %348 = vector.broadcast %306 : f32 to vector<8x128xf32>
    %349 = arith.mulf %348, %1 : vector<8x128xf32>
    %350 = arith.addf %347, %349 : vector<8x128xf32>
    %351 = vector.broadcast %309 : f32 to vector<8x128xf32>
    %352 = arith.addf %350, %351 : vector<8x128xf32>
    %353 = vector.broadcast %312 : f32 to vector<8x128xf32>
    %354 = arith.mulf %353, %3 : vector<8x128xf32>
    %355 = vector.broadcast %315 : f32 to vector<8x128xf32>
    %356 = arith.mulf %355, %1 : vector<8x128xf32>
    %357 = arith.addf %354, %356 : vector<8x128xf32>
    %358 = vector.broadcast %318 : f32 to vector<8x128xf32>
    %359 = arith.addf %357, %358 : vector<8x128xf32>
    %360 = vector.broadcast %321 : f32 to vector<8x128xf32>
    %361 = arith.mulf %360, %3 : vector<8x128xf32>
    %362 = vector.broadcast %324 : f32 to vector<8x128xf32>
    %363 = arith.mulf %362, %1 : vector<8x128xf32>
    %364 = arith.addf %361, %363 : vector<8x128xf32>
    %365 = vector.broadcast %327 : f32 to vector<8x128xf32>
    %366 = arith.addf %364, %365 : vector<8x128xf32>
    %cst_74 = arith.constant 0.000000e+00 : f32
    %367 = vector.broadcast %cst_74 : f32 to vector<8x128xf32>
    %368 = arith.cmpf oge, %352, %367 : vector<8x128xf32>
    %cst_75 = arith.constant 0.000000e+00 : f32
    %369 = vector.broadcast %cst_75 : f32 to vector<8x128xf32>
    %370 = arith.cmpf oge, %359, %369 : vector<8x128xf32>
    %371 = arith.andi %368, %370 : vector<8x128xi1>
    %cst_76 = arith.constant 0.000000e+00 : f32
    %372 = vector.broadcast %cst_76 : f32 to vector<8x128xf32>
    %373 = arith.cmpf oge, %366, %372 : vector<8x128xf32>
    %374 = arith.andi %371, %373 : vector<8x128xi1>
    %375 = vector.broadcast %330 : f32 to vector<8x128xf32>
    %376 = arith.mulf %375, %1 : vector<8x128xf32>
    %377 = vector.broadcast %333 : f32 to vector<8x128xf32>
    %378 = arith.mulf %377, %3 : vector<8x128xf32>
    %379 = arith.addf %376, %378 : vector<8x128xf32>
    %380 = vector.broadcast %336 : f32 to vector<8x128xf32>
    %381 = arith.addf %379, %380 : vector<8x128xf32>
    %cst_77 = arith.constant 0.000000e+00 : f32
    %382 = vector.broadcast %cst_77 : f32 to vector<8x128xf32>
    %383 = arith.cmpf ogt, %381, %382 : vector<8x128xf32>
    %384 = arith.andi %374, %383 : vector<8x128xi1>
    %385 = arith.cmpf olt, %381, %293 : vector<8x128xf32>
    %386 = arith.andi %384, %385 : vector<8x128xi1>
    %387 = arith.select %386, %381, %293 : vector<8x128xi1>, vector<8x128xf32>
    %388 = vector.broadcast %339 : f32 to vector<8x128xf32>
    %389 = arith.select %386, %388, %295 : vector<8x128xi1>, vector<8x128xf32>
    %390 = vector.broadcast %342 : f32 to vector<8x128xf32>
    %391 = arith.select %386, %390, %297 : vector<8x128xi1>, vector<8x128xf32>
    %392 = vector.broadcast %345 : f32 to vector<8x128xf32>
    %393 = arith.select %386, %392, %299 : vector<8x128xi1>, vector<8x128xf32>
    %c64_i32 = arith.constant 64 : i32
    %394 = arith.addi %13, %c64_i32 : i32
    %c0_i32_78 = arith.constant 0 : i32
    %395 = arith.addi %394, %c0_i32_78 : i32
    %396 = arith.index_cast %395 : i32 to index
    %397 = memref.load %arg1[%396] : memref<384xf32, #tpu.memory_space<smem>>
    %c1_i32_79 = arith.constant 1 : i32
    %398 = arith.addi %394, %c1_i32_79 : i32
    %399 = arith.index_cast %398 : i32 to index
    %400 = memref.load %arg1[%399] : memref<384xf32, #tpu.memory_space<smem>>
    %c2_i32_80 = arith.constant 2 : i32
    %401 = arith.addi %394, %c2_i32_80 : i32
    %402 = arith.index_cast %401 : i32 to index
    %403 = memref.load %arg1[%402] : memref<384xf32, #tpu.memory_space<smem>>
    %c3_i32_81 = arith.constant 3 : i32
    %404 = arith.addi %394, %c3_i32_81 : i32
    %405 = arith.index_cast %404 : i32 to index
    %406 = memref.load %arg1[%405] : memref<384xf32, #tpu.memory_space<smem>>
    %c4_i32_82 = arith.constant 4 : i32
    %407 = arith.addi %394, %c4_i32_82 : i32
    %408 = arith.index_cast %407 : i32 to index
    %409 = memref.load %arg1[%408] : memref<384xf32, #tpu.memory_space<smem>>
    %c5_i32_83 = arith.constant 5 : i32
    %410 = arith.addi %394, %c5_i32_83 : i32
    %411 = arith.index_cast %410 : i32 to index
    %412 = memref.load %arg1[%411] : memref<384xf32, #tpu.memory_space<smem>>
    %c6_i32_84 = arith.constant 6 : i32
    %413 = arith.addi %394, %c6_i32_84 : i32
    %414 = arith.index_cast %413 : i32 to index
    %415 = memref.load %arg1[%414] : memref<384xf32, #tpu.memory_space<smem>>
    %c7_i32_85 = arith.constant 7 : i32
    %416 = arith.addi %394, %c7_i32_85 : i32
    %417 = arith.index_cast %416 : i32 to index
    %418 = memref.load %arg1[%417] : memref<384xf32, #tpu.memory_space<smem>>
    %c8_i32_86 = arith.constant 8 : i32
    %419 = arith.addi %394, %c8_i32_86 : i32
    %420 = arith.index_cast %419 : i32 to index
    %421 = memref.load %arg1[%420] : memref<384xf32, #tpu.memory_space<smem>>
    %c9_i32_87 = arith.constant 9 : i32
    %422 = arith.addi %394, %c9_i32_87 : i32
    %423 = arith.index_cast %422 : i32 to index
    %424 = memref.load %arg1[%423] : memref<384xf32, #tpu.memory_space<smem>>
    %c10_i32_88 = arith.constant 10 : i32
    %425 = arith.addi %394, %c10_i32_88 : i32
    %426 = arith.index_cast %425 : i32 to index
    %427 = memref.load %arg1[%426] : memref<384xf32, #tpu.memory_space<smem>>
    %c11_i32_89 = arith.constant 11 : i32
    %428 = arith.addi %394, %c11_i32_89 : i32
    %429 = arith.index_cast %428 : i32 to index
    %430 = memref.load %arg1[%429] : memref<384xf32, #tpu.memory_space<smem>>
    %c12_i32_90 = arith.constant 12 : i32
    %431 = arith.addi %394, %c12_i32_90 : i32
    %432 = arith.index_cast %431 : i32 to index
    %433 = memref.load %arg1[%432] : memref<384xf32, #tpu.memory_space<smem>>
    %c13_i32_91 = arith.constant 13 : i32
    %434 = arith.addi %394, %c13_i32_91 : i32
    %435 = arith.index_cast %434 : i32 to index
    %436 = memref.load %arg1[%435] : memref<384xf32, #tpu.memory_space<smem>>
    %c14_i32_92 = arith.constant 14 : i32
    %437 = arith.addi %394, %c14_i32_92 : i32
    %438 = arith.index_cast %437 : i32 to index
    %439 = memref.load %arg1[%438] : memref<384xf32, #tpu.memory_space<smem>>
    %440 = vector.broadcast %397 : f32 to vector<8x128xf32>
    %441 = arith.mulf %440, %3 : vector<8x128xf32>
    %442 = vector.broadcast %400 : f32 to vector<8x128xf32>
    %443 = arith.mulf %442, %1 : vector<8x128xf32>
    %444 = arith.addf %441, %443 : vector<8x128xf32>
    %445 = vector.broadcast %403 : f32 to vector<8x128xf32>
    %446 = arith.addf %444, %445 : vector<8x128xf32>
    %447 = vector.broadcast %406 : f32 to vector<8x128xf32>
    %448 = arith.mulf %447, %3 : vector<8x128xf32>
    %449 = vector.broadcast %409 : f32 to vector<8x128xf32>
    %450 = arith.mulf %449, %1 : vector<8x128xf32>
    %451 = arith.addf %448, %450 : vector<8x128xf32>
    %452 = vector.broadcast %412 : f32 to vector<8x128xf32>
    %453 = arith.addf %451, %452 : vector<8x128xf32>
    %454 = vector.broadcast %415 : f32 to vector<8x128xf32>
    %455 = arith.mulf %454, %3 : vector<8x128xf32>
    %456 = vector.broadcast %418 : f32 to vector<8x128xf32>
    %457 = arith.mulf %456, %1 : vector<8x128xf32>
    %458 = arith.addf %455, %457 : vector<8x128xf32>
    %459 = vector.broadcast %421 : f32 to vector<8x128xf32>
    %460 = arith.addf %458, %459 : vector<8x128xf32>
    %cst_93 = arith.constant 0.000000e+00 : f32
    %461 = vector.broadcast %cst_93 : f32 to vector<8x128xf32>
    %462 = arith.cmpf oge, %446, %461 : vector<8x128xf32>
    %cst_94 = arith.constant 0.000000e+00 : f32
    %463 = vector.broadcast %cst_94 : f32 to vector<8x128xf32>
    %464 = arith.cmpf oge, %453, %463 : vector<8x128xf32>
    %465 = arith.andi %462, %464 : vector<8x128xi1>
    %cst_95 = arith.constant 0.000000e+00 : f32
    %466 = vector.broadcast %cst_95 : f32 to vector<8x128xf32>
    %467 = arith.cmpf oge, %460, %466 : vector<8x128xf32>
    %468 = arith.andi %465, %467 : vector<8x128xi1>
    %469 = vector.broadcast %424 : f32 to vector<8x128xf32>
    %470 = arith.mulf %469, %1 : vector<8x128xf32>
    %471 = vector.broadcast %427 : f32 to vector<8x128xf32>
    %472 = arith.mulf %471, %3 : vector<8x128xf32>
    %473 = arith.addf %470, %472 : vector<8x128xf32>
    %474 = vector.broadcast %430 : f32 to vector<8x128xf32>
    %475 = arith.addf %473, %474 : vector<8x128xf32>
    %cst_96 = arith.constant 0.000000e+00 : f32
    %476 = vector.broadcast %cst_96 : f32 to vector<8x128xf32>
    %477 = arith.cmpf ogt, %475, %476 : vector<8x128xf32>
    %478 = arith.andi %468, %477 : vector<8x128xi1>
    %479 = arith.cmpf olt, %475, %387 : vector<8x128xf32>
    %480 = arith.andi %478, %479 : vector<8x128xi1>
    %481 = arith.select %480, %475, %387 : vector<8x128xi1>, vector<8x128xf32>
    %482 = vector.broadcast %433 : f32 to vector<8x128xf32>
    %483 = arith.select %480, %482, %389 : vector<8x128xi1>, vector<8x128xf32>
    %484 = vector.broadcast %436 : f32 to vector<8x128xf32>
    %485 = arith.select %480, %484, %391 : vector<8x128xi1>, vector<8x128xf32>
    %486 = vector.broadcast %439 : f32 to vector<8x128xf32>
    %487 = arith.select %480, %486, %393 : vector<8x128xi1>, vector<8x128xf32>
    %c80_i32 = arith.constant 80 : i32
    %488 = arith.addi %13, %c80_i32 : i32
    %c0_i32_97 = arith.constant 0 : i32
    %489 = arith.addi %488, %c0_i32_97 : i32
    %490 = arith.index_cast %489 : i32 to index
    %491 = memref.load %arg1[%490] : memref<384xf32, #tpu.memory_space<smem>>
    %c1_i32_98 = arith.constant 1 : i32
    %492 = arith.addi %488, %c1_i32_98 : i32
    %493 = arith.index_cast %492 : i32 to index
    %494 = memref.load %arg1[%493] : memref<384xf32, #tpu.memory_space<smem>>
    %c2_i32_99 = arith.constant 2 : i32
    %495 = arith.addi %488, %c2_i32_99 : i32
    %496 = arith.index_cast %495 : i32 to index
    %497 = memref.load %arg1[%496] : memref<384xf32, #tpu.memory_space<smem>>
    %c3_i32_100 = arith.constant 3 : i32
    %498 = arith.addi %488, %c3_i32_100 : i32
    %499 = arith.index_cast %498 : i32 to index
    %500 = memref.load %arg1[%499] : memref<384xf32, #tpu.memory_space<smem>>
    %c4_i32_101 = arith.constant 4 : i32
    %501 = arith.addi %488, %c4_i32_101 : i32
    %502 = arith.index_cast %501 : i32 to index
    %503 = memref.load %arg1[%502] : memref<384xf32, #tpu.memory_space<smem>>
    %c5_i32_102 = arith.constant 5 : i32
    %504 = arith.addi %488, %c5_i32_102 : i32
    %505 = arith.index_cast %504 : i32 to index
    %506 = memref.load %arg1[%505] : memref<384xf32, #tpu.memory_space<smem>>
    %c6_i32_103 = arith.constant 6 : i32
    %507 = arith.addi %488, %c6_i32_103 : i32
    %508 = arith.index_cast %507 : i32 to index
    %509 = memref.load %arg1[%508] : memref<384xf32, #tpu.memory_space<smem>>
    %c7_i32_104 = arith.constant 7 : i32
    %510 = arith.addi %488, %c7_i32_104 : i32
    %511 = arith.index_cast %510 : i32 to index
    %512 = memref.load %arg1[%511] : memref<384xf32, #tpu.memory_space<smem>>
    %c8_i32_105 = arith.constant 8 : i32
    %513 = arith.addi %488, %c8_i32_105 : i32
    %514 = arith.index_cast %513 : i32 to index
    %515 = memref.load %arg1[%514] : memref<384xf32, #tpu.memory_space<smem>>
    %c9_i32_106 = arith.constant 9 : i32
    %516 = arith.addi %488, %c9_i32_106 : i32
    %517 = arith.index_cast %516 : i32 to index
    %518 = memref.load %arg1[%517] : memref<384xf32, #tpu.memory_space<smem>>
    %c10_i32_107 = arith.constant 10 : i32
    %519 = arith.addi %488, %c10_i32_107 : i32
    %520 = arith.index_cast %519 : i32 to index
    %521 = memref.load %arg1[%520] : memref<384xf32, #tpu.memory_space<smem>>
    %c11_i32_108 = arith.constant 11 : i32
    %522 = arith.addi %488, %c11_i32_108 : i32
    %523 = arith.index_cast %522 : i32 to index
    %524 = memref.load %arg1[%523] : memref<384xf32, #tpu.memory_space<smem>>
    %c12_i32_109 = arith.constant 12 : i32
    %525 = arith.addi %488, %c12_i32_109 : i32
    %526 = arith.index_cast %525 : i32 to index
    %527 = memref.load %arg1[%526] : memref<384xf32, #tpu.memory_space<smem>>
    %c13_i32_110 = arith.constant 13 : i32
    %528 = arith.addi %488, %c13_i32_110 : i32
    %529 = arith.index_cast %528 : i32 to index
    %530 = memref.load %arg1[%529] : memref<384xf32, #tpu.memory_space<smem>>
    %c14_i32_111 = arith.constant 14 : i32
    %531 = arith.addi %488, %c14_i32_111 : i32
    %532 = arith.index_cast %531 : i32 to index
    %533 = memref.load %arg1[%532] : memref<384xf32, #tpu.memory_space<smem>>
    %534 = vector.broadcast %491 : f32 to vector<8x128xf32>
    %535 = arith.mulf %534, %3 : vector<8x128xf32>
    %536 = vector.broadcast %494 : f32 to vector<8x128xf32>
    %537 = arith.mulf %536, %1 : vector<8x128xf32>
    %538 = arith.addf %535, %537 : vector<8x128xf32>
    %539 = vector.broadcast %497 : f32 to vector<8x128xf32>
    %540 = arith.addf %538, %539 : vector<8x128xf32>
    %541 = vector.broadcast %500 : f32 to vector<8x128xf32>
    %542 = arith.mulf %541, %3 : vector<8x128xf32>
    %543 = vector.broadcast %503 : f32 to vector<8x128xf32>
    %544 = arith.mulf %543, %1 : vector<8x128xf32>
    %545 = arith.addf %542, %544 : vector<8x128xf32>
    %546 = vector.broadcast %506 : f32 to vector<8x128xf32>
    %547 = arith.addf %545, %546 : vector<8x128xf32>
    %548 = vector.broadcast %509 : f32 to vector<8x128xf32>
    %549 = arith.mulf %548, %3 : vector<8x128xf32>
    %550 = vector.broadcast %512 : f32 to vector<8x128xf32>
    %551 = arith.mulf %550, %1 : vector<8x128xf32>
    %552 = arith.addf %549, %551 : vector<8x128xf32>
    %553 = vector.broadcast %515 : f32 to vector<8x128xf32>
    %554 = arith.addf %552, %553 : vector<8x128xf32>
    %cst_112 = arith.constant 0.000000e+00 : f32
    %555 = vector.broadcast %cst_112 : f32 to vector<8x128xf32>
    %556 = arith.cmpf oge, %540, %555 : vector<8x128xf32>
    %cst_113 = arith.constant 0.000000e+00 : f32
    %557 = vector.broadcast %cst_113 : f32 to vector<8x128xf32>
    %558 = arith.cmpf oge, %547, %557 : vector<8x128xf32>
    %559 = arith.andi %556, %558 : vector<8x128xi1>
    %cst_114 = arith.constant 0.000000e+00 : f32
    %560 = vector.broadcast %cst_114 : f32 to vector<8x128xf32>
    %561 = arith.cmpf oge, %554, %560 : vector<8x128xf32>
    %562 = arith.andi %559, %561 : vector<8x128xi1>
    %563 = vector.broadcast %518 : f32 to vector<8x128xf32>
    %564 = arith.mulf %563, %1 : vector<8x128xf32>
    %565 = vector.broadcast %521 : f32 to vector<8x128xf32>
    %566 = arith.mulf %565, %3 : vector<8x128xf32>
    %567 = arith.addf %564, %566 : vector<8x128xf32>
    %568 = vector.broadcast %524 : f32 to vector<8x128xf32>
    %569 = arith.addf %567, %568 : vector<8x128xf32>
    %cst_115 = arith.constant 0.000000e+00 : f32
    %570 = vector.broadcast %cst_115 : f32 to vector<8x128xf32>
    %571 = arith.cmpf ogt, %569, %570 : vector<8x128xf32>
    %572 = arith.andi %562, %571 : vector<8x128xi1>
    %573 = arith.cmpf olt, %569, %481 : vector<8x128xf32>
    %574 = arith.andi %572, %573 : vector<8x128xi1>
    %575 = arith.select %574, %569, %481 : vector<8x128xi1>, vector<8x128xf32>
    %576 = vector.broadcast %527 : f32 to vector<8x128xf32>
    %577 = arith.select %574, %576, %483 : vector<8x128xi1>, vector<8x128xf32>
    %578 = vector.broadcast %530 : f32 to vector<8x128xf32>
    %579 = arith.select %574, %578, %485 : vector<8x128xi1>, vector<8x128xf32>
    %580 = vector.broadcast %533 : f32 to vector<8x128xf32>
    %581 = arith.select %574, %580, %487 : vector<8x128xi1>, vector<8x128xf32>
    %c96_i32 = arith.constant 96 : i32
    %582 = arith.addi %13, %c96_i32 : i32
    %c0_i32_116 = arith.constant 0 : i32
    %583 = arith.addi %582, %c0_i32_116 : i32
    %584 = arith.index_cast %583 : i32 to index
    %585 = memref.load %arg1[%584] : memref<384xf32, #tpu.memory_space<smem>>
    %c1_i32_117 = arith.constant 1 : i32
    %586 = arith.addi %582, %c1_i32_117 : i32
    %587 = arith.index_cast %586 : i32 to index
    %588 = memref.load %arg1[%587] : memref<384xf32, #tpu.memory_space<smem>>
    %c2_i32_118 = arith.constant 2 : i32
    %589 = arith.addi %582, %c2_i32_118 : i32
    %590 = arith.index_cast %589 : i32 to index
    %591 = memref.load %arg1[%590] : memref<384xf32, #tpu.memory_space<smem>>
    %c3_i32_119 = arith.constant 3 : i32
    %592 = arith.addi %582, %c3_i32_119 : i32
    %593 = arith.index_cast %592 : i32 to index
    %594 = memref.load %arg1[%593] : memref<384xf32, #tpu.memory_space<smem>>
    %c4_i32_120 = arith.constant 4 : i32
    %595 = arith.addi %582, %c4_i32_120 : i32
    %596 = arith.index_cast %595 : i32 to index
    %597 = memref.load %arg1[%596] : memref<384xf32, #tpu.memory_space<smem>>
    %c5_i32_121 = arith.constant 5 : i32
    %598 = arith.addi %582, %c5_i32_121 : i32
    %599 = arith.index_cast %598 : i32 to index
    %600 = memref.load %arg1[%599] : memref<384xf32, #tpu.memory_space<smem>>
    %c6_i32_122 = arith.constant 6 : i32
    %601 = arith.addi %582, %c6_i32_122 : i32
    %602 = arith.index_cast %601 : i32 to index
    %603 = memref.load %arg1[%602] : memref<384xf32, #tpu.memory_space<smem>>
    %c7_i32_123 = arith.constant 7 : i32
    %604 = arith.addi %582, %c7_i32_123 : i32
    %605 = arith.index_cast %604 : i32 to index
    %606 = memref.load %arg1[%605] : memref<384xf32, #tpu.memory_space<smem>>
    %c8_i32_124 = arith.constant 8 : i32
    %607 = arith.addi %582, %c8_i32_124 : i32
    %608 = arith.index_cast %607 : i32 to index
    %609 = memref.load %arg1[%608] : memref<384xf32, #tpu.memory_space<smem>>
    %c9_i32_125 = arith.constant 9 : i32
    %610 = arith.addi %582, %c9_i32_125 : i32
    %611 = arith.index_cast %610 : i32 to index
    %612 = memref.load %arg1[%611] : memref<384xf32, #tpu.memory_space<smem>>
    %c10_i32_126 = arith.constant 10 : i32
    %613 = arith.addi %582, %c10_i32_126 : i32
    %614 = arith.index_cast %613 : i32 to index
    %615 = memref.load %arg1[%614] : memref<384xf32, #tpu.memory_space<smem>>
    %c11_i32_127 = arith.constant 11 : i32
    %616 = arith.addi %582, %c11_i32_127 : i32
    %617 = arith.index_cast %616 : i32 to index
    %618 = memref.load %arg1[%617] : memref<384xf32, #tpu.memory_space<smem>>
    %c12_i32_128 = arith.constant 12 : i32
    %619 = arith.addi %582, %c12_i32_128 : i32
    %620 = arith.index_cast %619 : i32 to index
    %621 = memref.load %arg1[%620] : memref<384xf32, #tpu.memory_space<smem>>
    %c13_i32_129 = arith.constant 13 : i32
    %622 = arith.addi %582, %c13_i32_129 : i32
    %623 = arith.index_cast %622 : i32 to index
    %624 = memref.load %arg1[%623] : memref<384xf32, #tpu.memory_space<smem>>
    %c14_i32_130 = arith.constant 14 : i32
    %625 = arith.addi %582, %c14_i32_130 : i32
    %626 = arith.index_cast %625 : i32 to index
    %627 = memref.load %arg1[%626] : memref<384xf32, #tpu.memory_space<smem>>
    %628 = vector.broadcast %585 : f32 to vector<8x128xf32>
    %629 = arith.mulf %628, %3 : vector<8x128xf32>
    %630 = vector.broadcast %588 : f32 to vector<8x128xf32>
    %631 = arith.mulf %630, %1 : vector<8x128xf32>
    %632 = arith.addf %629, %631 : vector<8x128xf32>
    %633 = vector.broadcast %591 : f32 to vector<8x128xf32>
    %634 = arith.addf %632, %633 : vector<8x128xf32>
    %635 = vector.broadcast %594 : f32 to vector<8x128xf32>
    %636 = arith.mulf %635, %3 : vector<8x128xf32>
    %637 = vector.broadcast %597 : f32 to vector<8x128xf32>
    %638 = arith.mulf %637, %1 : vector<8x128xf32>
    %639 = arith.addf %636, %638 : vector<8x128xf32>
    %640 = vector.broadcast %600 : f32 to vector<8x128xf32>
    %641 = arith.addf %639, %640 : vector<8x128xf32>
    %642 = vector.broadcast %603 : f32 to vector<8x128xf32>
    %643 = arith.mulf %642, %3 : vector<8x128xf32>
    %644 = vector.broadcast %606 : f32 to vector<8x128xf32>
    %645 = arith.mulf %644, %1 : vector<8x128xf32>
    %646 = arith.addf %643, %645 : vector<8x128xf32>
    %647 = vector.broadcast %609 : f32 to vector<8x128xf32>
    %648 = arith.addf %646, %647 : vector<8x128xf32>
    %cst_131 = arith.constant 0.000000e+00 : f32
    %649 = vector.broadcast %cst_131 : f32 to vector<8x128xf32>
    %650 = arith.cmpf oge, %634, %649 : vector<8x128xf32>
    %cst_132 = arith.constant 0.000000e+00 : f32
    %651 = vector.broadcast %cst_132 : f32 to vector<8x128xf32>
    %652 = arith.cmpf oge, %641, %651 : vector<8x128xf32>
    %653 = arith.andi %650, %652 : vector<8x128xi1>
    %cst_133 = arith.constant 0.000000e+00 : f32
    %654 = vector.broadcast %cst_133 : f32 to vector<8x128xf32>
    %655 = arith.cmpf oge, %648, %654 : vector<8x128xf32>
    %656 = arith.andi %653, %655 : vector<8x128xi1>
    %657 = vector.broadcast %612 : f32 to vector<8x128xf32>
    %658 = arith.mulf %657, %1 : vector<8x128xf32>
    %659 = vector.broadcast %615 : f32 to vector<8x128xf32>
    %660 = arith.mulf %659, %3 : vector<8x128xf32>
    %661 = arith.addf %658, %660 : vector<8x128xf32>
    %662 = vector.broadcast %618 : f32 to vector<8x128xf32>
    %663 = arith.addf %661, %662 : vector<8x128xf32>
    %cst_134 = arith.constant 0.000000e+00 : f32
    %664 = vector.broadcast %cst_134 : f32 to vector<8x128xf32>
    %665 = arith.cmpf ogt, %663, %664 : vector<8x128xf32>
    %666 = arith.andi %656, %665 : vector<8x128xi1>
    %667 = arith.cmpf olt, %663, %575 : vector<8x128xf32>
    %668 = arith.andi %666, %667 : vector<8x128xi1>
    %669 = arith.select %668, %663, %575 : vector<8x128xi1>, vector<8x128xf32>
    %670 = vector.broadcast %621 : f32 to vector<8x128xf32>
    %671 = arith.select %668, %670, %577 : vector<8x128xi1>, vector<8x128xf32>
    %672 = vector.broadcast %624 : f32 to vector<8x128xf32>
    %673 = arith.select %668, %672, %579 : vector<8x128xi1>, vector<8x128xf32>
    %674 = vector.broadcast %627 : f32 to vector<8x128xf32>
    %675 = arith.select %668, %674, %581 : vector<8x128xi1>, vector<8x128xf32>
    %c112_i32 = arith.constant 112 : i32
    %676 = arith.addi %13, %c112_i32 : i32
    %c0_i32_135 = arith.constant 0 : i32
    %677 = arith.addi %676, %c0_i32_135 : i32
    %678 = arith.index_cast %677 : i32 to index
    %679 = memref.load %arg1[%678] : memref<384xf32, #tpu.memory_space<smem>>
    %c1_i32_136 = arith.constant 1 : i32
    %680 = arith.addi %676, %c1_i32_136 : i32
    %681 = arith.index_cast %680 : i32 to index
    %682 = memref.load %arg1[%681] : memref<384xf32, #tpu.memory_space<smem>>
    %c2_i32_137 = arith.constant 2 : i32
    %683 = arith.addi %676, %c2_i32_137 : i32
    %684 = arith.index_cast %683 : i32 to index
    %685 = memref.load %arg1[%684] : memref<384xf32, #tpu.memory_space<smem>>
    %c3_i32_138 = arith.constant 3 : i32
    %686 = arith.addi %676, %c3_i32_138 : i32
    %687 = arith.index_cast %686 : i32 to index
    %688 = memref.load %arg1[%687] : memref<384xf32, #tpu.memory_space<smem>>
    %c4_i32_139 = arith.constant 4 : i32
    %689 = arith.addi %676, %c4_i32_139 : i32
    %690 = arith.index_cast %689 : i32 to index
    %691 = memref.load %arg1[%690] : memref<384xf32, #tpu.memory_space<smem>>
    %c5_i32_140 = arith.constant 5 : i32
    %692 = arith.addi %676, %c5_i32_140 : i32
    %693 = arith.index_cast %692 : i32 to index
    %694 = memref.load %arg1[%693] : memref<384xf32, #tpu.memory_space<smem>>
    %c6_i32_141 = arith.constant 6 : i32
    %695 = arith.addi %676, %c6_i32_141 : i32
    %696 = arith.index_cast %695 : i32 to index
    %697 = memref.load %arg1[%696] : memref<384xf32, #tpu.memory_space<smem>>
    %c7_i32_142 = arith.constant 7 : i32
    %698 = arith.addi %676, %c7_i32_142 : i32
    %699 = arith.index_cast %698 : i32 to index
    %700 = memref.load %arg1[%699] : memref<384xf32, #tpu.memory_space<smem>>
    %c8_i32_143 = arith.constant 8 : i32
    %701 = arith.addi %676, %c8_i32_143 : i32
    %702 = arith.index_cast %701 : i32 to index
    %703 = memref.load %arg1[%702] : memref<384xf32, #tpu.memory_space<smem>>
    %c9_i32_144 = arith.constant 9 : i32
    %704 = arith.addi %676, %c9_i32_144 : i32
    %705 = arith.index_cast %704 : i32 to index
    %706 = memref.load %arg1[%705] : memref<384xf32, #tpu.memory_space<smem>>
    %c10_i32_145 = arith.constant 10 : i32
    %707 = arith.addi %676, %c10_i32_145 : i32
    %708 = arith.index_cast %707 : i32 to index
    %709 = memref.load %arg1[%708] : memref<384xf32, #tpu.memory_space<smem>>
    %c11_i32_146 = arith.constant 11 : i32
    %710 = arith.addi %676, %c11_i32_146 : i32
    %711 = arith.index_cast %710 : i32 to index
    %712 = memref.load %arg1[%711] : memref<384xf32, #tpu.memory_space<smem>>
    %c12_i32_147 = arith.constant 12 : i32
    %713 = arith.addi %676, %c12_i32_147 : i32
    %714 = arith.index_cast %713 : i32 to index
    %715 = memref.load %arg1[%714] : memref<384xf32, #tpu.memory_space<smem>>
    %c13_i32_148 = arith.constant 13 : i32
    %716 = arith.addi %676, %c13_i32_148 : i32
    %717 = arith.index_cast %716 : i32 to index
    %718 = memref.load %arg1[%717] : memref<384xf32, #tpu.memory_space<smem>>
    %c14_i32_149 = arith.constant 14 : i32
    %719 = arith.addi %676, %c14_i32_149 : i32
    %720 = arith.index_cast %719 : i32 to index
    %721 = memref.load %arg1[%720] : memref<384xf32, #tpu.memory_space<smem>>
    %722 = vector.broadcast %679 : f32 to vector<8x128xf32>
    %723 = arith.mulf %722, %3 : vector<8x128xf32>
    %724 = vector.broadcast %682 : f32 to vector<8x128xf32>
    %725 = arith.mulf %724, %1 : vector<8x128xf32>
    %726 = arith.addf %723, %725 : vector<8x128xf32>
    %727 = vector.broadcast %685 : f32 to vector<8x128xf32>
    %728 = arith.addf %726, %727 : vector<8x128xf32>
    %729 = vector.broadcast %688 : f32 to vector<8x128xf32>
    %730 = arith.mulf %729, %3 : vector<8x128xf32>
    %731 = vector.broadcast %691 : f32 to vector<8x128xf32>
    %732 = arith.mulf %731, %1 : vector<8x128xf32>
    %733 = arith.addf %730, %732 : vector<8x128xf32>
    %734 = vector.broadcast %694 : f32 to vector<8x128xf32>
    %735 = arith.addf %733, %734 : vector<8x128xf32>
    %736 = vector.broadcast %697 : f32 to vector<8x128xf32>
    %737 = arith.mulf %736, %3 : vector<8x128xf32>
    %738 = vector.broadcast %700 : f32 to vector<8x128xf32>
    %739 = arith.mulf %738, %1 : vector<8x128xf32>
    %740 = arith.addf %737, %739 : vector<8x128xf32>
    %741 = vector.broadcast %703 : f32 to vector<8x128xf32>
    %742 = arith.addf %740, %741 : vector<8x128xf32>
    %cst_150 = arith.constant 0.000000e+00 : f32
    %743 = vector.broadcast %cst_150 : f32 to vector<8x128xf32>
    %744 = arith.cmpf oge, %728, %743 : vector<8x128xf32>
    %cst_151 = arith.constant 0.000000e+00 : f32
    %745 = vector.broadcast %cst_151 : f32 to vector<8x128xf32>
    %746 = arith.cmpf oge, %735, %745 : vector<8x128xf32>
    %747 = arith.andi %744, %746 : vector<8x128xi1>
    %cst_152 = arith.constant 0.000000e+00 : f32
    %748 = vector.broadcast %cst_152 : f32 to vector<8x128xf32>
    %749 = arith.cmpf oge, %742, %748 : vector<8x128xf32>
    %750 = arith.andi %747, %749 : vector<8x128xi1>
    %751 = vector.broadcast %706 : f32 to vector<8x128xf32>
    %752 = arith.mulf %751, %1 : vector<8x128xf32>
    %753 = vector.broadcast %709 : f32 to vector<8x128xf32>
    %754 = arith.mulf %753, %3 : vector<8x128xf32>
    %755 = arith.addf %752, %754 : vector<8x128xf32>
    %756 = vector.broadcast %712 : f32 to vector<8x128xf32>
    %757 = arith.addf %755, %756 : vector<8x128xf32>
    %cst_153 = arith.constant 0.000000e+00 : f32
    %758 = vector.broadcast %cst_153 : f32 to vector<8x128xf32>
    %759 = arith.cmpf ogt, %757, %758 : vector<8x128xf32>
    %760 = arith.andi %750, %759 : vector<8x128xi1>
    %761 = arith.cmpf olt, %757, %669 : vector<8x128xf32>
    %762 = arith.andi %760, %761 : vector<8x128xi1>
    %763 = arith.select %762, %757, %669 : vector<8x128xi1>, vector<8x128xf32>
    %764 = vector.broadcast %715 : f32 to vector<8x128xf32>
    %765 = arith.select %762, %764, %671 : vector<8x128xi1>, vector<8x128xf32>
    %766 = vector.broadcast %718 : f32 to vector<8x128xf32>
    %767 = arith.select %762, %766, %673 : vector<8x128xi1>, vector<8x128xf32>
    %768 = vector.broadcast %721 : f32 to vector<8x128xf32>
    %769 = arith.select %762, %768, %675 : vector<8x128xi1>, vector<8x128xf32>
    %c128_i32 = arith.constant 128 : i32
    %770 = arith.addi %13, %c128_i32 : i32
    %c0_i32_154 = arith.constant 0 : i32
    %771 = arith.addi %770, %c0_i32_154 : i32
    %772 = arith.index_cast %771 : i32 to index
    %773 = memref.load %arg1[%772] : memref<384xf32, #tpu.memory_space<smem>>
    %c1_i32_155 = arith.constant 1 : i32
    %774 = arith.addi %770, %c1_i32_155 : i32
    %775 = arith.index_cast %774 : i32 to index
    %776 = memref.load %arg1[%775] : memref<384xf32, #tpu.memory_space<smem>>
    %c2_i32_156 = arith.constant 2 : i32
    %777 = arith.addi %770, %c2_i32_156 : i32
    %778 = arith.index_cast %777 : i32 to index
    %779 = memref.load %arg1[%778] : memref<384xf32, #tpu.memory_space<smem>>
    %c3_i32_157 = arith.constant 3 : i32
    %780 = arith.addi %770, %c3_i32_157 : i32
    %781 = arith.index_cast %780 : i32 to index
    %782 = memref.load %arg1[%781] : memref<384xf32, #tpu.memory_space<smem>>
    %c4_i32_158 = arith.constant 4 : i32
    %783 = arith.addi %770, %c4_i32_158 : i32
    %784 = arith.index_cast %783 : i32 to index
    %785 = memref.load %arg1[%784] : memref<384xf32, #tpu.memory_space<smem>>
    %c5_i32_159 = arith.constant 5 : i32
    %786 = arith.addi %770, %c5_i32_159 : i32
    %787 = arith.index_cast %786 : i32 to index
    %788 = memref.load %arg1[%787] : memref<384xf32, #tpu.memory_space<smem>>
    %c6_i32_160 = arith.constant 6 : i32
    %789 = arith.addi %770, %c6_i32_160 : i32
    %790 = arith.index_cast %789 : i32 to index
    %791 = memref.load %arg1[%790] : memref<384xf32, #tpu.memory_space<smem>>
    %c7_i32_161 = arith.constant 7 : i32
    %792 = arith.addi %770, %c7_i32_161 : i32
    %793 = arith.index_cast %792 : i32 to index
    %794 = memref.load %arg1[%793] : memref<384xf32, #tpu.memory_space<smem>>
    %c8_i32_162 = arith.constant 8 : i32
    %795 = arith.addi %770, %c8_i32_162 : i32
    %796 = arith.index_cast %795 : i32 to index
    %797 = memref.load %arg1[%796] : memref<384xf32, #tpu.memory_space<smem>>
    %c9_i32_163 = arith.constant 9 : i32
    %798 = arith.addi %770, %c9_i32_163 : i32
    %799 = arith.index_cast %798 : i32 to index
    %800 = memref.load %arg1[%799] : memref<384xf32, #tpu.memory_space<smem>>
    %c10_i32_164 = arith.constant 10 : i32
    %801 = arith.addi %770, %c10_i32_164 : i32
    %802 = arith.index_cast %801 : i32 to index
    %803 = memref.load %arg1[%802] : memref<384xf32, #tpu.memory_space<smem>>
    %c11_i32_165 = arith.constant 11 : i32
    %804 = arith.addi %770, %c11_i32_165 : i32
    %805 = arith.index_cast %804 : i32 to index
    %806 = memref.load %arg1[%805] : memref<384xf32, #tpu.memory_space<smem>>
    %c12_i32_166 = arith.constant 12 : i32
    %807 = arith.addi %770, %c12_i32_166 : i32
    %808 = arith.index_cast %807 : i32 to index
    %809 = memref.load %arg1[%808] : memref<384xf32, #tpu.memory_space<smem>>
    %c13_i32_167 = arith.constant 13 : i32
    %810 = arith.addi %770, %c13_i32_167 : i32
    %811 = arith.index_cast %810 : i32 to index
    %812 = memref.load %arg1[%811] : memref<384xf32, #tpu.memory_space<smem>>
    %c14_i32_168 = arith.constant 14 : i32
    %813 = arith.addi %770, %c14_i32_168 : i32
    %814 = arith.index_cast %813 : i32 to index
    %815 = memref.load %arg1[%814] : memref<384xf32, #tpu.memory_space<smem>>
    %816 = vector.broadcast %773 : f32 to vector<8x128xf32>
    %817 = arith.mulf %816, %3 : vector<8x128xf32>
    %818 = vector.broadcast %776 : f32 to vector<8x128xf32>
    %819 = arith.mulf %818, %1 : vector<8x128xf32>
    %820 = arith.addf %817, %819 : vector<8x128xf32>
    %821 = vector.broadcast %779 : f32 to vector<8x128xf32>
    %822 = arith.addf %820, %821 : vector<8x128xf32>
    %823 = vector.broadcast %782 : f32 to vector<8x128xf32>
    %824 = arith.mulf %823, %3 : vector<8x128xf32>
    %825 = vector.broadcast %785 : f32 to vector<8x128xf32>
    %826 = arith.mulf %825, %1 : vector<8x128xf32>
    %827 = arith.addf %824, %826 : vector<8x128xf32>
    %828 = vector.broadcast %788 : f32 to vector<8x128xf32>
    %829 = arith.addf %827, %828 : vector<8x128xf32>
    %830 = vector.broadcast %791 : f32 to vector<8x128xf32>
    %831 = arith.mulf %830, %3 : vector<8x128xf32>
    %832 = vector.broadcast %794 : f32 to vector<8x128xf32>
    %833 = arith.mulf %832, %1 : vector<8x128xf32>
    %834 = arith.addf %831, %833 : vector<8x128xf32>
    %835 = vector.broadcast %797 : f32 to vector<8x128xf32>
    %836 = arith.addf %834, %835 : vector<8x128xf32>
    %cst_169 = arith.constant 0.000000e+00 : f32
    %837 = vector.broadcast %cst_169 : f32 to vector<8x128xf32>
    %838 = arith.cmpf oge, %822, %837 : vector<8x128xf32>
    %cst_170 = arith.constant 0.000000e+00 : f32
    %839 = vector.broadcast %cst_170 : f32 to vector<8x128xf32>
    %840 = arith.cmpf oge, %829, %839 : vector<8x128xf32>
    %841 = arith.andi %838, %840 : vector<8x128xi1>
    %cst_171 = arith.constant 0.000000e+00 : f32
    %842 = vector.broadcast %cst_171 : f32 to vector<8x128xf32>
    %843 = arith.cmpf oge, %836, %842 : vector<8x128xf32>
    %844 = arith.andi %841, %843 : vector<8x128xi1>
    %845 = vector.broadcast %800 : f32 to vector<8x128xf32>
    %846 = arith.mulf %845, %1 : vector<8x128xf32>
    %847 = vector.broadcast %803 : f32 to vector<8x128xf32>
    %848 = arith.mulf %847, %3 : vector<8x128xf32>
    %849 = arith.addf %846, %848 : vector<8x128xf32>
    %850 = vector.broadcast %806 : f32 to vector<8x128xf32>
    %851 = arith.addf %849, %850 : vector<8x128xf32>
    %cst_172 = arith.constant 0.000000e+00 : f32
    %852 = vector.broadcast %cst_172 : f32 to vector<8x128xf32>
    %853 = arith.cmpf ogt, %851, %852 : vector<8x128xf32>
    %854 = arith.andi %844, %853 : vector<8x128xi1>
    %855 = arith.cmpf olt, %851, %763 : vector<8x128xf32>
    %856 = arith.andi %854, %855 : vector<8x128xi1>
    %857 = arith.select %856, %851, %763 : vector<8x128xi1>, vector<8x128xf32>
    %858 = vector.broadcast %809 : f32 to vector<8x128xf32>
    %859 = arith.select %856, %858, %765 : vector<8x128xi1>, vector<8x128xf32>
    %860 = vector.broadcast %812 : f32 to vector<8x128xf32>
    %861 = arith.select %856, %860, %767 : vector<8x128xi1>, vector<8x128xf32>
    %862 = vector.broadcast %815 : f32 to vector<8x128xf32>
    %863 = arith.select %856, %862, %769 : vector<8x128xi1>, vector<8x128xf32>
    %c144_i32 = arith.constant 144 : i32
    %864 = arith.addi %13, %c144_i32 : i32
    %c0_i32_173 = arith.constant 0 : i32
    %865 = arith.addi %864, %c0_i32_173 : i32
    %866 = arith.index_cast %865 : i32 to index
    %867 = memref.load %arg1[%866] : memref<384xf32, #tpu.memory_space<smem>>
    %c1_i32_174 = arith.constant 1 : i32
    %868 = arith.addi %864, %c1_i32_174 : i32
    %869 = arith.index_cast %868 : i32 to index
    %870 = memref.load %arg1[%869] : memref<384xf32, #tpu.memory_space<smem>>
    %c2_i32_175 = arith.constant 2 : i32
    %871 = arith.addi %864, %c2_i32_175 : i32
    %872 = arith.index_cast %871 : i32 to index
    %873 = memref.load %arg1[%872] : memref<384xf32, #tpu.memory_space<smem>>
    %c3_i32_176 = arith.constant 3 : i32
    %874 = arith.addi %864, %c3_i32_176 : i32
    %875 = arith.index_cast %874 : i32 to index
    %876 = memref.load %arg1[%875] : memref<384xf32, #tpu.memory_space<smem>>
    %c4_i32_177 = arith.constant 4 : i32
    %877 = arith.addi %864, %c4_i32_177 : i32
    %878 = arith.index_cast %877 : i32 to index
    %879 = memref.load %arg1[%878] : memref<384xf32, #tpu.memory_space<smem>>
    %c5_i32_178 = arith.constant 5 : i32
    %880 = arith.addi %864, %c5_i32_178 : i32
    %881 = arith.index_cast %880 : i32 to index
    %882 = memref.load %arg1[%881] : memref<384xf32, #tpu.memory_space<smem>>
    %c6_i32_179 = arith.constant 6 : i32
    %883 = arith.addi %864, %c6_i32_179 : i32
    %884 = arith.index_cast %883 : i32 to index
    %885 = memref.load %arg1[%884] : memref<384xf32, #tpu.memory_space<smem>>
    %c7_i32_180 = arith.constant 7 : i32
    %886 = arith.addi %864, %c7_i32_180 : i32
    %887 = arith.index_cast %886 : i32 to index
    %888 = memref.load %arg1[%887] : memref<384xf32, #tpu.memory_space<smem>>
    %c8_i32_181 = arith.constant 8 : i32
    %889 = arith.addi %864, %c8_i32_181 : i32
    %890 = arith.index_cast %889 : i32 to index
    %891 = memref.load %arg1[%890] : memref<384xf32, #tpu.memory_space<smem>>
    %c9_i32_182 = arith.constant 9 : i32
    %892 = arith.addi %864, %c9_i32_182 : i32
    %893 = arith.index_cast %892 : i32 to index
    %894 = memref.load %arg1[%893] : memref<384xf32, #tpu.memory_space<smem>>
    %c10_i32_183 = arith.constant 10 : i32
    %895 = arith.addi %864, %c10_i32_183 : i32
    %896 = arith.index_cast %895 : i32 to index
    %897 = memref.load %arg1[%896] : memref<384xf32, #tpu.memory_space<smem>>
    %c11_i32_184 = arith.constant 11 : i32
    %898 = arith.addi %864, %c11_i32_184 : i32
    %899 = arith.index_cast %898 : i32 to index
    %900 = memref.load %arg1[%899] : memref<384xf32, #tpu.memory_space<smem>>
    %c12_i32_185 = arith.constant 12 : i32
    %901 = arith.addi %864, %c12_i32_185 : i32
    %902 = arith.index_cast %901 : i32 to index
    %903 = memref.load %arg1[%902] : memref<384xf32, #tpu.memory_space<smem>>
    %c13_i32_186 = arith.constant 13 : i32
    %904 = arith.addi %864, %c13_i32_186 : i32
    %905 = arith.index_cast %904 : i32 to index
    %906 = memref.load %arg1[%905] : memref<384xf32, #tpu.memory_space<smem>>
    %c14_i32_187 = arith.constant 14 : i32
    %907 = arith.addi %864, %c14_i32_187 : i32
    %908 = arith.index_cast %907 : i32 to index
    %909 = memref.load %arg1[%908] : memref<384xf32, #tpu.memory_space<smem>>
    %910 = vector.broadcast %867 : f32 to vector<8x128xf32>
    %911 = arith.mulf %910, %3 : vector<8x128xf32>
    %912 = vector.broadcast %870 : f32 to vector<8x128xf32>
    %913 = arith.mulf %912, %1 : vector<8x128xf32>
    %914 = arith.addf %911, %913 : vector<8x128xf32>
    %915 = vector.broadcast %873 : f32 to vector<8x128xf32>
    %916 = arith.addf %914, %915 : vector<8x128xf32>
    %917 = vector.broadcast %876 : f32 to vector<8x128xf32>
    %918 = arith.mulf %917, %3 : vector<8x128xf32>
    %919 = vector.broadcast %879 : f32 to vector<8x128xf32>
    %920 = arith.mulf %919, %1 : vector<8x128xf32>
    %921 = arith.addf %918, %920 : vector<8x128xf32>
    %922 = vector.broadcast %882 : f32 to vector<8x128xf32>
    %923 = arith.addf %921, %922 : vector<8x128xf32>
    %924 = vector.broadcast %885 : f32 to vector<8x128xf32>
    %925 = arith.mulf %924, %3 : vector<8x128xf32>
    %926 = vector.broadcast %888 : f32 to vector<8x128xf32>
    %927 = arith.mulf %926, %1 : vector<8x128xf32>
    %928 = arith.addf %925, %927 : vector<8x128xf32>
    %929 = vector.broadcast %891 : f32 to vector<8x128xf32>
    %930 = arith.addf %928, %929 : vector<8x128xf32>
    %cst_188 = arith.constant 0.000000e+00 : f32
    %931 = vector.broadcast %cst_188 : f32 to vector<8x128xf32>
    %932 = arith.cmpf oge, %916, %931 : vector<8x128xf32>
    %cst_189 = arith.constant 0.000000e+00 : f32
    %933 = vector.broadcast %cst_189 : f32 to vector<8x128xf32>
    %934 = arith.cmpf oge, %923, %933 : vector<8x128xf32>
    %935 = arith.andi %932, %934 : vector<8x128xi1>
    %cst_190 = arith.constant 0.000000e+00 : f32
    %936 = vector.broadcast %cst_190 : f32 to vector<8x128xf32>
    %937 = arith.cmpf oge, %930, %936 : vector<8x128xf32>
    %938 = arith.andi %935, %937 : vector<8x128xi1>
    %939 = vector.broadcast %894 : f32 to vector<8x128xf32>
    %940 = arith.mulf %939, %1 : vector<8x128xf32>
    %941 = vector.broadcast %897 : f32 to vector<8x128xf32>
    %942 = arith.mulf %941, %3 : vector<8x128xf32>
    %943 = arith.addf %940, %942 : vector<8x128xf32>
    %944 = vector.broadcast %900 : f32 to vector<8x128xf32>
    %945 = arith.addf %943, %944 : vector<8x128xf32>
    %cst_191 = arith.constant 0.000000e+00 : f32
    %946 = vector.broadcast %cst_191 : f32 to vector<8x128xf32>
    %947 = arith.cmpf ogt, %945, %946 : vector<8x128xf32>
    %948 = arith.andi %938, %947 : vector<8x128xi1>
    %949 = arith.cmpf olt, %945, %857 : vector<8x128xf32>
    %950 = arith.andi %948, %949 : vector<8x128xi1>
    %951 = arith.select %950, %945, %857 : vector<8x128xi1>, vector<8x128xf32>
    %952 = vector.broadcast %903 : f32 to vector<8x128xf32>
    %953 = arith.select %950, %952, %859 : vector<8x128xi1>, vector<8x128xf32>
    %954 = vector.broadcast %906 : f32 to vector<8x128xf32>
    %955 = arith.select %950, %954, %861 : vector<8x128xi1>, vector<8x128xf32>
    %956 = vector.broadcast %909 : f32 to vector<8x128xf32>
    %957 = arith.select %950, %956, %863 : vector<8x128xi1>, vector<8x128xf32>
    %c160_i32 = arith.constant 160 : i32
    %958 = arith.addi %13, %c160_i32 : i32
    %c0_i32_192 = arith.constant 0 : i32
    %959 = arith.addi %958, %c0_i32_192 : i32
    %960 = arith.index_cast %959 : i32 to index
    %961 = memref.load %arg1[%960] : memref<384xf32, #tpu.memory_space<smem>>
    %c1_i32_193 = arith.constant 1 : i32
    %962 = arith.addi %958, %c1_i32_193 : i32
    %963 = arith.index_cast %962 : i32 to index
    %964 = memref.load %arg1[%963] : memref<384xf32, #tpu.memory_space<smem>>
    %c2_i32_194 = arith.constant 2 : i32
    %965 = arith.addi %958, %c2_i32_194 : i32
    %966 = arith.index_cast %965 : i32 to index
    %967 = memref.load %arg1[%966] : memref<384xf32, #tpu.memory_space<smem>>
    %c3_i32_195 = arith.constant 3 : i32
    %968 = arith.addi %958, %c3_i32_195 : i32
    %969 = arith.index_cast %968 : i32 to index
    %970 = memref.load %arg1[%969] : memref<384xf32, #tpu.memory_space<smem>>
    %c4_i32_196 = arith.constant 4 : i32
    %971 = arith.addi %958, %c4_i32_196 : i32
    %972 = arith.index_cast %971 : i32 to index
    %973 = memref.load %arg1[%972] : memref<384xf32, #tpu.memory_space<smem>>
    %c5_i32_197 = arith.constant 5 : i32
    %974 = arith.addi %958, %c5_i32_197 : i32
    %975 = arith.index_cast %974 : i32 to index
    %976 = memref.load %arg1[%975] : memref<384xf32, #tpu.memory_space<smem>>
    %c6_i32_198 = arith.constant 6 : i32
    %977 = arith.addi %958, %c6_i32_198 : i32
    %978 = arith.index_cast %977 : i32 to index
    %979 = memref.load %arg1[%978] : memref<384xf32, #tpu.memory_space<smem>>
    %c7_i32_199 = arith.constant 7 : i32
    %980 = arith.addi %958, %c7_i32_199 : i32
    %981 = arith.index_cast %980 : i32 to index
    %982 = memref.load %arg1[%981] : memref<384xf32, #tpu.memory_space<smem>>
    %c8_i32_200 = arith.constant 8 : i32
    %983 = arith.addi %958, %c8_i32_200 : i32
    %984 = arith.index_cast %983 : i32 to index
    %985 = memref.load %arg1[%984] : memref<384xf32, #tpu.memory_space<smem>>
    %c9_i32_201 = arith.constant 9 : i32
    %986 = arith.addi %958, %c9_i32_201 : i32
    %987 = arith.index_cast %986 : i32 to index
    %988 = memref.load %arg1[%987] : memref<384xf32, #tpu.memory_space<smem>>
    %c10_i32_202 = arith.constant 10 : i32
    %989 = arith.addi %958, %c10_i32_202 : i32
    %990 = arith.index_cast %989 : i32 to index
    %991 = memref.load %arg1[%990] : memref<384xf32, #tpu.memory_space<smem>>
    %c11_i32_203 = arith.constant 11 : i32
    %992 = arith.addi %958, %c11_i32_203 : i32
    %993 = arith.index_cast %992 : i32 to index
    %994 = memref.load %arg1[%993] : memref<384xf32, #tpu.memory_space<smem>>
    %c12_i32_204 = arith.constant 12 : i32
    %995 = arith.addi %958, %c12_i32_204 : i32
    %996 = arith.index_cast %995 : i32 to index
    %997 = memref.load %arg1[%996] : memref<384xf32, #tpu.memory_space<smem>>
    %c13_i32_205 = arith.constant 13 : i32
    %998 = arith.addi %958, %c13_i32_205 : i32
    %999 = arith.index_cast %998 : i32 to index
    %1000 = memref.load %arg1[%999] : memref<384xf32, #tpu.memory_space<smem>>
    %c14_i32_206 = arith.constant 14 : i32
    %1001 = arith.addi %958, %c14_i32_206 : i32
    %1002 = arith.index_cast %1001 : i32 to index
    %1003 = memref.load %arg1[%1002] : memref<384xf32, #tpu.memory_space<smem>>
    %1004 = vector.broadcast %961 : f32 to vector<8x128xf32>
    %1005 = arith.mulf %1004, %3 : vector<8x128xf32>
    %1006 = vector.broadcast %964 : f32 to vector<8x128xf32>
    %1007 = arith.mulf %1006, %1 : vector<8x128xf32>
    %1008 = arith.addf %1005, %1007 : vector<8x128xf32>
    %1009 = vector.broadcast %967 : f32 to vector<8x128xf32>
    %1010 = arith.addf %1008, %1009 : vector<8x128xf32>
    %1011 = vector.broadcast %970 : f32 to vector<8x128xf32>
    %1012 = arith.mulf %1011, %3 : vector<8x128xf32>
    %1013 = vector.broadcast %973 : f32 to vector<8x128xf32>
    %1014 = arith.mulf %1013, %1 : vector<8x128xf32>
    %1015 = arith.addf %1012, %1014 : vector<8x128xf32>
    %1016 = vector.broadcast %976 : f32 to vector<8x128xf32>
    %1017 = arith.addf %1015, %1016 : vector<8x128xf32>
    %1018 = vector.broadcast %979 : f32 to vector<8x128xf32>
    %1019 = arith.mulf %1018, %3 : vector<8x128xf32>
    %1020 = vector.broadcast %982 : f32 to vector<8x128xf32>
    %1021 = arith.mulf %1020, %1 : vector<8x128xf32>
    %1022 = arith.addf %1019, %1021 : vector<8x128xf32>
    %1023 = vector.broadcast %985 : f32 to vector<8x128xf32>
    %1024 = arith.addf %1022, %1023 : vector<8x128xf32>
    %cst_207 = arith.constant 0.000000e+00 : f32
    %1025 = vector.broadcast %cst_207 : f32 to vector<8x128xf32>
    %1026 = arith.cmpf oge, %1010, %1025 : vector<8x128xf32>
    %cst_208 = arith.constant 0.000000e+00 : f32
    %1027 = vector.broadcast %cst_208 : f32 to vector<8x128xf32>
    %1028 = arith.cmpf oge, %1017, %1027 : vector<8x128xf32>
    %1029 = arith.andi %1026, %1028 : vector<8x128xi1>
    %cst_209 = arith.constant 0.000000e+00 : f32
    %1030 = vector.broadcast %cst_209 : f32 to vector<8x128xf32>
    %1031 = arith.cmpf oge, %1024, %1030 : vector<8x128xf32>
    %1032 = arith.andi %1029, %1031 : vector<8x128xi1>
    %1033 = vector.broadcast %988 : f32 to vector<8x128xf32>
    %1034 = arith.mulf %1033, %1 : vector<8x128xf32>
    %1035 = vector.broadcast %991 : f32 to vector<8x128xf32>
    %1036 = arith.mulf %1035, %3 : vector<8x128xf32>
    %1037 = arith.addf %1034, %1036 : vector<8x128xf32>
    %1038 = vector.broadcast %994 : f32 to vector<8x128xf32>
    %1039 = arith.addf %1037, %1038 : vector<8x128xf32>
    %cst_210 = arith.constant 0.000000e+00 : f32
    %1040 = vector.broadcast %cst_210 : f32 to vector<8x128xf32>
    %1041 = arith.cmpf ogt, %1039, %1040 : vector<8x128xf32>
    %1042 = arith.andi %1032, %1041 : vector<8x128xi1>
    %1043 = arith.cmpf olt, %1039, %951 : vector<8x128xf32>
    %1044 = arith.andi %1042, %1043 : vector<8x128xi1>
    %1045 = arith.select %1044, %1039, %951 : vector<8x128xi1>, vector<8x128xf32>
    %1046 = vector.broadcast %997 : f32 to vector<8x128xf32>
    %1047 = arith.select %1044, %1046, %953 : vector<8x128xi1>, vector<8x128xf32>
    %1048 = vector.broadcast %1000 : f32 to vector<8x128xf32>
    %1049 = arith.select %1044, %1048, %955 : vector<8x128xi1>, vector<8x128xf32>
    %1050 = vector.broadcast %1003 : f32 to vector<8x128xf32>
    %1051 = arith.select %1044, %1050, %957 : vector<8x128xi1>, vector<8x128xf32>
    %c176_i32 = arith.constant 176 : i32
    %1052 = arith.addi %13, %c176_i32 : i32
    %c0_i32_211 = arith.constant 0 : i32
    %1053 = arith.addi %1052, %c0_i32_211 : i32
    %1054 = arith.index_cast %1053 : i32 to index
    %1055 = memref.load %arg1[%1054] : memref<384xf32, #tpu.memory_space<smem>>
    %c1_i32_212 = arith.constant 1 : i32
    %1056 = arith.addi %1052, %c1_i32_212 : i32
    %1057 = arith.index_cast %1056 : i32 to index
    %1058 = memref.load %arg1[%1057] : memref<384xf32, #tpu.memory_space<smem>>
    %c2_i32_213 = arith.constant 2 : i32
    %1059 = arith.addi %1052, %c2_i32_213 : i32
    %1060 = arith.index_cast %1059 : i32 to index
    %1061 = memref.load %arg1[%1060] : memref<384xf32, #tpu.memory_space<smem>>
    %c3_i32_214 = arith.constant 3 : i32
    %1062 = arith.addi %1052, %c3_i32_214 : i32
    %1063 = arith.index_cast %1062 : i32 to index
    %1064 = memref.load %arg1[%1063] : memref<384xf32, #tpu.memory_space<smem>>
    %c4_i32_215 = arith.constant 4 : i32
    %1065 = arith.addi %1052, %c4_i32_215 : i32
    %1066 = arith.index_cast %1065 : i32 to index
    %1067 = memref.load %arg1[%1066] : memref<384xf32, #tpu.memory_space<smem>>
    %c5_i32_216 = arith.constant 5 : i32
    %1068 = arith.addi %1052, %c5_i32_216 : i32
    %1069 = arith.index_cast %1068 : i32 to index
    %1070 = memref.load %arg1[%1069] : memref<384xf32, #tpu.memory_space<smem>>
    %c6_i32_217 = arith.constant 6 : i32
    %1071 = arith.addi %1052, %c6_i32_217 : i32
    %1072 = arith.index_cast %1071 : i32 to index
    %1073 = memref.load %arg1[%1072] : memref<384xf32, #tpu.memory_space<smem>>
    %c7_i32_218 = arith.constant 7 : i32
    %1074 = arith.addi %1052, %c7_i32_218 : i32
    %1075 = arith.index_cast %1074 : i32 to index
    %1076 = memref.load %arg1[%1075] : memref<384xf32, #tpu.memory_space<smem>>
    %c8_i32_219 = arith.constant 8 : i32
    %1077 = arith.addi %1052, %c8_i32_219 : i32
    %1078 = arith.index_cast %1077 : i32 to index
    %1079 = memref.load %arg1[%1078] : memref<384xf32, #tpu.memory_space<smem>>
    %c9_i32_220 = arith.constant 9 : i32
    %1080 = arith.addi %1052, %c9_i32_220 : i32
    %1081 = arith.index_cast %1080 : i32 to index
    %1082 = memref.load %arg1[%1081] : memref<384xf32, #tpu.memory_space<smem>>
    %c10_i32_221 = arith.constant 10 : i32
    %1083 = arith.addi %1052, %c10_i32_221 : i32
    %1084 = arith.index_cast %1083 : i32 to index
    %1085 = memref.load %arg1[%1084] : memref<384xf32, #tpu.memory_space<smem>>
    %c11_i32_222 = arith.constant 11 : i32
    %1086 = arith.addi %1052, %c11_i32_222 : i32
    %1087 = arith.index_cast %1086 : i32 to index
    %1088 = memref.load %arg1[%1087] : memref<384xf32, #tpu.memory_space<smem>>
    %c12_i32_223 = arith.constant 12 : i32
    %1089 = arith.addi %1052, %c12_i32_223 : i32
    %1090 = arith.index_cast %1089 : i32 to index
    %1091 = memref.load %arg1[%1090] : memref<384xf32, #tpu.memory_space<smem>>
    %c13_i32_224 = arith.constant 13 : i32
    %1092 = arith.addi %1052, %c13_i32_224 : i32
    %1093 = arith.index_cast %1092 : i32 to index
    %1094 = memref.load %arg1[%1093] : memref<384xf32, #tpu.memory_space<smem>>
    %c14_i32_225 = arith.constant 14 : i32
    %1095 = arith.addi %1052, %c14_i32_225 : i32
    %1096 = arith.index_cast %1095 : i32 to index
    %1097 = memref.load %arg1[%1096] : memref<384xf32, #tpu.memory_space<smem>>
    %1098 = vector.broadcast %1055 : f32 to vector<8x128xf32>
    %1099 = arith.mulf %1098, %3 : vector<8x128xf32>
    %1100 = vector.broadcast %1058 : f32 to vector<8x128xf32>
    %1101 = arith.mulf %1100, %1 : vector<8x128xf32>
    %1102 = arith.addf %1099, %1101 : vector<8x128xf32>
    %1103 = vector.broadcast %1061 : f32 to vector<8x128xf32>
    %1104 = arith.addf %1102, %1103 : vector<8x128xf32>
    %1105 = vector.broadcast %1064 : f32 to vector<8x128xf32>
    %1106 = arith.mulf %1105, %3 : vector<8x128xf32>
    %1107 = vector.broadcast %1067 : f32 to vector<8x128xf32>
    %1108 = arith.mulf %1107, %1 : vector<8x128xf32>
    %1109 = arith.addf %1106, %1108 : vector<8x128xf32>
    %1110 = vector.broadcast %1070 : f32 to vector<8x128xf32>
    %1111 = arith.addf %1109, %1110 : vector<8x128xf32>
    %1112 = vector.broadcast %1073 : f32 to vector<8x128xf32>
    %1113 = arith.mulf %1112, %3 : vector<8x128xf32>
    %1114 = vector.broadcast %1076 : f32 to vector<8x128xf32>
    %1115 = arith.mulf %1114, %1 : vector<8x128xf32>
    %1116 = arith.addf %1113, %1115 : vector<8x128xf32>
    %1117 = vector.broadcast %1079 : f32 to vector<8x128xf32>
    %1118 = arith.addf %1116, %1117 : vector<8x128xf32>
    %cst_226 = arith.constant 0.000000e+00 : f32
    %1119 = vector.broadcast %cst_226 : f32 to vector<8x128xf32>
    %1120 = arith.cmpf oge, %1104, %1119 : vector<8x128xf32>
    %cst_227 = arith.constant 0.000000e+00 : f32
    %1121 = vector.broadcast %cst_227 : f32 to vector<8x128xf32>
    %1122 = arith.cmpf oge, %1111, %1121 : vector<8x128xf32>
    %1123 = arith.andi %1120, %1122 : vector<8x128xi1>
    %cst_228 = arith.constant 0.000000e+00 : f32
    %1124 = vector.broadcast %cst_228 : f32 to vector<8x128xf32>
    %1125 = arith.cmpf oge, %1118, %1124 : vector<8x128xf32>
    %1126 = arith.andi %1123, %1125 : vector<8x128xi1>
    %1127 = vector.broadcast %1082 : f32 to vector<8x128xf32>
    %1128 = arith.mulf %1127, %1 : vector<8x128xf32>
    %1129 = vector.broadcast %1085 : f32 to vector<8x128xf32>
    %1130 = arith.mulf %1129, %3 : vector<8x128xf32>
    %1131 = arith.addf %1128, %1130 : vector<8x128xf32>
    %1132 = vector.broadcast %1088 : f32 to vector<8x128xf32>
    %1133 = arith.addf %1131, %1132 : vector<8x128xf32>
    %cst_229 = arith.constant 0.000000e+00 : f32
    %1134 = vector.broadcast %cst_229 : f32 to vector<8x128xf32>
    %1135 = arith.cmpf ogt, %1133, %1134 : vector<8x128xf32>
    %1136 = arith.andi %1126, %1135 : vector<8x128xi1>
    %1137 = arith.cmpf olt, %1133, %1045 : vector<8x128xf32>
    %1138 = arith.andi %1136, %1137 : vector<8x128xi1>
    %1139 = vector.broadcast %1091 : f32 to vector<8x128xf32>
    %1140 = arith.select %1138, %1139, %1047 : vector<8x128xi1>, vector<8x128xf32>
    %1141 = vector.broadcast %1094 : f32 to vector<8x128xf32>
    %1142 = arith.select %1138, %1141, %1049 : vector<8x128xi1>, vector<8x128xf32>
    %1143 = vector.broadcast %1097 : f32 to vector<8x128xf32>
    %1144 = arith.select %1138, %1143, %1051 : vector<8x128xi1>, vector<8x128xf32>
    %1145 = arith.subf %1140, %5 : vector<8x128xf32>
    %1146 = arith.subf %1142, %7 : vector<8x128xf32>
    %1147 = arith.subf %1144, %9 : vector<8x128xf32>
    %1148 = arith.mulf %1145, %1145 : vector<8x128xf32>
    %1149 = arith.addf %10, %1148 : vector<8x128xf32>
    %1150 = arith.mulf %1146, %1146 : vector<8x128xf32>
    %1151 = arith.addf %1149, %1150 : vector<8x128xf32>
    %1152 = arith.mulf %1147, %1147 : vector<8x128xf32>
    %1153 = arith.addf %1151, %1152 : vector<8x128xf32>
    %1154 = vector.shape_cast %1153 : vector<8x128xf32> to vector<1x8x128xf32>
    %c0_230 = arith.constant 0 : index
    %c0_231 = arith.constant 0 : index
    %c0_232 = arith.constant 0 : index
    %1155 = vector.load %arg3[%c0_230, %c0_231, %c0_232] : memref<1x8x128xf32, #tpu.memory_space<vmem>>, vector<1x8x128xf32>
    tpu.vector_store %arg3[%c0_230, %c0_231, %c0_232], %1154 {strides = array<i32>} : memref<1x8x128xf32, #tpu.memory_space<vmem>>, vector<1x8x128xf32>,
    return
  }
  func.func @transform_0(%arg0: i32) -> i32 {
    %c0_i32 = arith.constant 0 : i32
    %c0_i32_0 = arith.constant 0 : i32
    return %c0_i32 : i32
  }
  func.func @transform_1(%arg0: i32) -> (i32, i32, i32) {
    %c0_i32 = arith.constant 0 : i32
    %c0_i32_0 = arith.constant 0 : i32
    %c0_i32_1 = arith.constant 0 : i32
    %c0_i32_2 = arith.constant 0 : i32
    return %c0_i32, %c0_i32_0, %c0_i32_1 : i32, i32, i32
  }
  func.func @transform_2(%arg0: i32) -> (i32, i32, i32) {
    %c0_i32 = arith.constant 0 : i32
    %c0_i32_0 = arith.constant 0 : i32
    %c0_i32_1 = arith.constant 0 : i32
    return %arg0, %c0_i32, %c0_i32_0 : i32, i32, i32
  }
}

</mosaic_0001>

<llo_original>
// kernel: squeeze.40
$region0: #{squeeze.40}
  %s0 = inlined_call_operand.vmem [shape: f32[1,3,32,32], index: 0, kind: input, shape index: {}]
  %s1 = inlined_call_operand.vmem [shape: f32[3,8,128], index: 1, kind: output, shape index: {}]
  %v2 = vld [vmem:[%s0] ss:$4 sm:$0xff]
  %vm3 = vcmask 261120
  %4 = vst.msk [vmem:[%s1] sm:$0xff] %vm3, %v2
  %s5 = scalar_lea.vmem %s0, 32
  %v6 = vld [vmem:[%s5] ss:$4 sm:$0xff]
  %vm7 = vcmask 261120
  %s8 = scalar_lea.vmem %s1, 8
  %9 = vst.msk [vmem:[%s8] sm:$0xff] %vm7, %v6
  %s10 = scalar_lea.vmem %s0, 64
  %v11 = vld [vmem:[%s10] ss:$4 sm:$0xff]
  %vm12 = vcmask 261120
  %s13 = scalar_lea.vmem %s1, 16
  %14 = vst.msk [vmem:[%s13] sm:$0xff] %vm12, %v11
  %s15 = scalar_lea.vmem %s0, 3
  %v16 = vld [vmem:[%s15] ss:$4 sm:$0xff]
  %17 = vrot.lane.b32.xlu0 %v16, 96
  %v18 = vpop.permute.xlu0 %17
  %vm19 = vcmask 1048320
  %20 = vst.msk [vmem:[%s1] sm:$0xff] %vm19, %v18
  %s21 = scalar_lea.vmem %s0, 35
  %v22 = vld [vmem:[%s21] ss:$4 sm:$0xff]
  %23 = vrot.lane.b32.xlu0 %v22, 96
  %v24 = vpop.permute.xlu0 %23
  %vm25 = vcmask 1048320
  %s26 = scalar_lea.vmem %s1, 8
  %27 = vst.msk [vmem:[%s26] sm:$0xff] %vm25, %v24
  %s28 = scalar_lea.vmem %s0, 67
  %v29 = vld [vmem:[%s28] ss:$4 sm:$0xff]
  %30 = vrot.lane.b32.xlu0 %v29, 96
  %v31 = vpop.permute.xlu0 %30
  %vm32 = vcmask 1048320
  %s33 = scalar_lea.vmem %s1, 16
  %34 = vst.msk [vmem:[%s33] sm:$0xff] %vm32, %v31
  %s35 = scalar_lea.vmem %s0, 2
  %v36 = vld [vmem:[%s35] ss:$4 sm:$0xff]
  %37 = vrot.lane.b32.xlu0 %v36, 64
  %v38 = vpop.permute.xlu0 %37
  %vm39 = vcmask 785920
  %40 = vst.msk [vmem:[%s1] sm:$0xff] %vm39, %v38
  %s41 = scalar_lea.vmem %s0, 34
  %v42 = vld [vmem:[%s41] ss:$4 sm:$0xff]
  %43 = vrot.lane.b32.xlu0 %v42, 64
  %v44 = vpop.permute.xlu0 %43
  %vm45 = vcmask 785920
  %s46 = scalar_lea.vmem %s1, 8
  %47 = vst.msk [vmem:[%s46] sm:$0xff] %vm45, %v44
  %s48 = scalar_lea.vmem %s0, 66
  %v49 = vld [vmem:[%s48] ss:$4 sm:$0xff]
  %50 = vrot.lane.b32.xlu0 %v49, 64
  %v51 = vpop.permute.xlu0 %50
  %vm52 = vcmask 785920
  %s53 = scalar_lea.vmem %s1, 16
  %54 = vst.msk [vmem:[%s53] sm:$0xff] %vm52, %v51
  %s55 = scalar_lea.vmem %s0, 1
  %v56 = vld [vmem:[%s55] ss:$4 sm:$0xff]
  %57 = vrot.lane.b32.xlu0 %v56, 32
  %v58 = vpop.permute.xlu0 %57
  %vm59 = vcmask 523520
  %60 = vst.msk [vmem:[%s1] sm:$0xff] %vm59, %v58
  %s61 = scalar_lea.vmem %s0, 33
  %v62 = vld [vmem:[%s61] ss:$4 sm:$0xff]
  %63 = vrot.lane.b32.xlu0 %v62, 32
  %v64 = vpop.permute.xlu0 %63
  %vm65 = vcmask 523520
  %s66 = scalar_lea.vmem %s1, 8
  %67 = vst.msk [vmem:[%s66] sm:$0xff] %vm65, %v64
  %s68 = scalar_lea.vmem %s0, 65
  %v69 = vld [vmem:[%s68] ss:$4 sm:$0xff]
  %70 = vrot.lane.b32.xlu0 %v69, 32
  %v71 = vpop.permute.xlu0 %70
  %vm72 = vcmask 523520
  %s73 = scalar_lea.vmem %s1, 16
  %74 = vst.msk [vmem:[%s73] sm:$0xff] %vm72, %v71

// kernel: mesh_renderer_forward.1
$region0: #{mesh_renderer_forward.1}
  #allocation0 [shape = 'u32[]', space=smem, size = 0x4, offset = 0x4, fixed_abs, tag = 'smem constant byte address 0x4 - core index']
  #allocation1 [shape = 'u32[144,128]{1,0:T(1,128)}', space=vmem, size = 0x12000, scoped, tag = 'internal scratch']
  %s0 = inlined_call_operand.vmem [shape: f32[384], index: 0, kind: input, shape index: {}]
  %s1 = inlined_call_operand.vmem [shape: f32[5,8,128], index: 1, kind: input, shape index: {}]
  %s2 = inlined_call_operand.vmem [shape: f32[2,8,128], index: 2, kind: output, shape index: {}]
  %s3 = sld [smem:[#allocation0]]
  $region45: #{mesh_renderer_forward.1} parent=0
    _
  %s5 = ssub.s32 1, %s3
  %s6 = scalar_select 0, %s5, %s3
  $region1: #{mesh_renderer_forward.1} parent=0
    #allocation2 [shape = 'u8[1536]{0}', space=smem, size = 0x600, scoped, tag = 'input window, operand 0, single buffered']
    #allocation3 [shape = 's32[2]{0}', space=sflag, size = 0x8, scoped, tag = 'scoped memory for mesh_renderer_forward.1']
    %7 = vsyncpa [#allocation3], 0
    loop: start=0, step=1, limit=4
    $region2: #{mesh_renderer_forward.1} parent=1 // loop_pre_header
      _
    $region3: #{mesh_renderer_forward.1} parent=1 // loop_header
      %s9 = sphi 0, %s13
      %p10 = scmp.ge.s32.totalorder %s9, 4
      %s17 = sphi 0, %s17
      %s19 = sphi 0, %s17
      %s20 = sphi 0, %s19
      %s34 = sphi 0, %s20
      %s38 = sphi 0, %s38
      %s40 = sphi 0, %s38
      %s41 = sphi 0, %s40
      %s55 = sphi 0, %s41
      %s61 = sphi 0, %s63
      %s64 = sphi 0, %s61
      %s65 = sphi 0, %s64
      %s81 = sphi 0, %s65
    $region4: #{mesh_renderer_forward.1} parent=1 // loop_header_branch
      %12 = sbr.rel (%p10) target = $region8
    $region5: #{mesh_renderer_forward.1} parent=1 // loop_body
      %s14 = ssub.s32 %s9, 1
      %s15 = ssub.s32 %s9, 2
      %s16 = sadd.s32 %s9, 1
      %s18 = sadd.s32 %s17, 1
      %p21 = scmp.eq.s32.totalorder %s9, 1
      %p22 = scmp.ne.s32.totalorder %s17, %s19
      %p23 = scmp.eq.s32.totalorder %s9, 0
      %p24 = por %p22, %p23
      %p25 = scmp.ne.s32.totalorder %s17, %s19
      %p26 = scmp.eq.s32.totalorder %s14, 1
      %p27 = por %p25, %p26
      %p28 = scmp.ne.s32.totalorder %s19, %s20
      %p29 = scmp.eq.s32.totalorder %s14, 0
      %p30 = por %p28, %p29
      %p31 = scmp.ne.s32.totalorder %s19, %s20
      %p32 = scmp.eq.s32.totalorder %s15, 1
      %p33 = por %p31, %p32
      %p35 = scmp.ne.s32.totalorder %s20, %s34
      %p36 = scmp.eq.s32.totalorder %s15, 0
      %p37 = por %p35, %p36
      %s39 = sadd.s32 %s38, 1
      %p42 = scmp.eq.s32.totalorder %s9, 1
      %p43 = scmp.ne.s32.totalorder %s38, %s40
      %p44 = scmp.eq.s32.totalorder %s9, 0
      %p45 = por %p43, %p44
      %p46 = scmp.ne.s32.totalorder %s38, %s40
      %p47 = scmp.eq.s32.totalorder %s14, 1
      %p48 = por %p46, %p47
      %p49 = scmp.ne.s32.totalorder %s40, %s41
      %p50 = scmp.eq.s32.totalorder %s14, 0
      %p51 = por %p49, %p50
      %p52 = scmp.ne.s32.totalorder %s40, %s41
      %p53 = scmp.eq.s32.totalorder %s15, 1
      %p54 = por %p52, %p53
      %p56 = scmp.ne.s32.totalorder %s41, %s55
      %p57 = scmp.eq.s32.totalorder %s15, 0
      %p58 = por %p56, %p57
      %s59 = ssub.s32 %s9, %s16
      %p60 = scmp.eq.s32.totalorder %s59, 0
      %s62 = sadd.s32 %s61, 1
      %s63 = scalar_select %p60, %s61, %s62
      %p66 = pneg %p60
      %p67 = scmp.eq.s32.totalorder %s9, 1
      %p68 = por %p66, %p67
      %p69 = scmp.ne.s32.totalorder %s61, %s64
      %p70 = scmp.eq.s32.totalorder %s9, 0
      %p71 = por %p69, %p70
      %p72 = scmp.ne.s32.totalorder %s61, %s64
      %p73 = scmp.eq.s32.totalorder %s14, 1
      %p74 = por %p72, %p73
      %p75 = scmp.ne.s32.totalorder %s64, %s65
      %p76 = scmp.eq.s32.totalorder %s14, 0
      %p77 = por %p75, %p76
      %p78 = scmp.ne.s32.totalorder %s64, %s65
      %p79 = scmp.eq.s32.totalorder %s15, 1
      %p80 = por %p78, %p79
      %p82 = scmp.ne.s32.totalorder %s65, %s81
      %p83 = scmp.eq.s32.totalorder %s15, 0
      %p84 = por %p82, %p83
      %p85 = scmp.le.s32.totalorder 1, %s9
      %p86 = scmp.lt.s32.totalorder %s9, 3
      %p87 = pnand %p85, %p86
      %p88 = pneg %p87
      // Predicated region
      $region9: #{mesh_renderer_forward.1} parent=5 // pred_check
        _
      $region10: #{mesh_renderer_forward.1} parent=5 // pred_check_branch
        %90 = sbr.rel (%p87) target = $region12
      $region11: #{mesh_renderer_forward.1} parent=5 // pred_region
        %s91 = ssub.s32 %s9, 1
        // Predicated region
        $region13: #{mesh_renderer_forward.1} parent=11 // pred_check
          %p92 = pneg %p30
        $region14: #{mesh_renderer_forward.1} parent=11 // pred_check_branch
          %94 = sbr.rel (%p92) target = $region16
        $region15: #{mesh_renderer_forward.1} parent=11 // pred_region
          %s96 = ssub.s32 48, 48
          %97 = vsyncadd [#allocation3], %s96
          %s99 = sshll.u32 %s0, 4
          %s100 = int_to_ptr.vmem [resolvable:$true] %s99
          %102 = dma.vmem_to_smem %s100, 48, [#allocation2], [#allocation3]
        $region16: #{mesh_renderer_forward.1} parent=11 // pred_fallthru
          _
        // Predicated region
        $region17: #{mesh_renderer_forward.1} parent=11 // pred_check
          %p103 = pneg %p51
        $region18: #{mesh_renderer_forward.1} parent=11 // pred_check_branch
          %105 = sbr.rel (%p103) target = $region20
        $region19: #{mesh_renderer_forward.1} parent=11 // pred_region
          _
        $region20: #{mesh_renderer_forward.1} parent=11 // pred_fallthru
          _
      $region12: #{mesh_renderer_forward.1} parent=5 // pred_fallthru
        _
      %p106 = scmp.lt.s32.totalorder %s9, 2
      // Predicated region
      $region21: #{mesh_renderer_forward.1} parent=5 // pred_check
        %p107 = pneg %p106
      $region22: #{mesh_renderer_forward.1} parent=5 // pred_check_branch
        %109 = sbr.rel (%p107) target = $region24
      $region23: #{mesh_renderer_forward.1} parent=5 // pred_region
        _
      $region24: #{mesh_renderer_forward.1} parent=5 // pred_fallthru
        _
      %p110 = scmp.le.s32.totalorder 1, %s9
      %p111 = scmp.lt.s32.totalorder %s9, 3
      %p112 = pnand %p110, %p111
      %p113 = pneg %p112
      // Predicated region
      $region25: #{mesh_renderer_forward.1} parent=5 // pred_check
        _
      $region26: #{mesh_renderer_forward.1} parent=5 // pred_check_branch
        %115 = sbr.rel (%p112) target = $region28
      $region27: #{mesh_renderer_forward.1} parent=5 // pred_region
        %s116 = ssub.s32 %s9, 1
        // Predicated region
        $region29: #{mesh_renderer_forward.1} parent=27 // pred_check
          %p117 = pneg %p30
        $region30: #{mesh_renderer_forward.1} parent=27 // pred_check_branch
          %119 = sbr.rel (%p117) target = $region32
        $region31: #{mesh_renderer_forward.1} parent=27 // pred_region
          %120 = dma.done [#allocation3], 48
        $region32: #{mesh_renderer_forward.1} parent=27 // pred_fallthru
          _
        %121 = sfence
        %p122 = pneg %p30
        %p123 = pneg %p27
        %p124 = pneg %p51
        %p125 = pneg %p48
        %p126 = pneg %p77
        %p127 = pneg %p74
        %p128 = scmp.lt.s32.totalorder %s14, 1
        %s129 = scalar_select %p128, %s14, 1
        %s130 = smul.addr %s129, 8
        %s131 = scalar_lea.vmem %s2, %s130
        %p132 = scmp.lt.s32.totalorder %s14, 1
        %s133 = scalar_select %p132, %s14, 1
        %s134 = smul.addr %s133, 8
        %s135 = scalar_lea.vmem %s2, %s134
        %v136 = vld [vmem:[%s1] sm:$0xff]
        %s137 = scalar_lea.vmem %s1, 8
        %v138 = vld [vmem:[%s137] sm:$0xff]
        %s139 = scalar_lea.vmem %s1, 16
        %v140 = vld [vmem:[%s139] sm:$0xff]
        %s141 = scalar_lea.vmem %s1, 24
        %v142 = vld [vmem:[%s141] sm:$0xff]
        %s143 = scalar_lea.vmem %s1, 32
        %v144 = vld [vmem:[%s143] sm:$0xff]
        %s145 = smul.u32 %s14, 192
        %s146 = sld [smem:[#allocation2 + %s145]]
        %s147 = sadd.s32 %s145, 1
        %s148 = sld [smem:[#allocation2 + %s147]]
        %s149 = sadd.s32 %s145, 2
        %s150 = sld [smem:[#allocation2 + %s149]]
        %s151 = sadd.s32 %s145, 3
        %s152 = sld [smem:[#allocation2 + %s151]]
        %s153 = sadd.s32 %s145, 4
        %s154 = sld [smem:[#allocation2 + %s153]]
        %s155 = sadd.s32 %s145, 5
        %s156 = sld [smem:[#allocation2 + %s155]]
        %s157 = sadd.s32 %s145, 6
        %s158 = sld [smem:[#allocation2 + %s157]]
        %s159 = sadd.s32 %s145, 7
        %s160 = sld [smem:[#allocation2 + %s159]]
        %s161 = sadd.s32 %s145, 8
        %s162 = sld [smem:[#allocation2 + %s161]]
        %s163 = sadd.s32 %s145, 9
        %s164 = sld [smem:[#allocation2 + %s163]]
        %s165 = sadd.s32 %s145, 10
        %s166 = sld [smem:[#allocation2 + %s165]]
        %s167 = sadd.s32 %s145, 11
        %s168 = sld [smem:[#allocation2 + %s167]]
        %s169 = sadd.s32 %s145, 12
        %s170 = sld [smem:[#allocation2 + %s169]]
        %s171 = sadd.s32 %s145, 13
        %s172 = sld [smem:[#allocation2 + %s171]]
        %s173 = sadd.s32 %s145, 14
        %s174 = sld [smem:[#allocation2 + %s173]]
        %v175 = vstv %s146
        %v176 = vmul.f32 %v175, %v138
        %v177 = vstv %s148
        %v178 = vmul.f32 %v177, %v136
        %v179 = vadd.f32 %v176, %v178
        %v180 = vstv %s150
        %v181 = vadd.f32 %v179, %v180
        %v182 = vstv %s152
        %v183 = vmul.f32 %v182, %v138
        %v184 = vstv %s154
        %v185 = vmul.f32 %v184, %v136
        %v186 = vadd.f32 %v183, %v185
        %v187 = vstv %s156
        %v188 = vadd.f32 %v186, %v187
        %v189 = vstv %s158
        %v190 = vmul.f32 %v189, %v138
        %v191 = vstv %s160
        %v192 = vmul.f32 %v191, %v136
        %v193 = vadd.f32 %v190, %v192
        %v194 = vstv %s162
        %v195 = vadd.f32 %v193, %v194
        %vm196 = vcmp.ge.f32.partialorder %v181, 0.0
        %vm197 = vcmp.ge.f32.partialorder %v188, 0.0
        %vm198 = vmand %vm196, %vm197
        %vm199 = vcmp.ge.f32.partialorder %v195, 0.0
        %vm200 = vmand %vm198, %vm199
        %v201 = vstv %s164
        %v202 = vmul.f32 %v201, %v136
        %v203 = vstv %s166
        %v204 = vmul.f32 %v203, %v138
        %v205 = vadd.f32 %v202, %v204
        %v206 = vstv %s168
        %v207 = vadd.f32 %v205, %v206
        %vm208 = vcmp.gt.f32.partialorder %v207, 0.0
        %vm209 = vmand %vm200, %vm208
        %vm210 = vcmp.lt.f32.partialorder %v207, 1e+30
        %vm211 = vmand %vm209, %vm210
        %v212 = vsel %vm211, %v207, 1e+30
        %v213 = vstv %s170
        %v214 = vsel %vm211, %v213, 0.0
        %v215 = vstv %s172
        %v216 = vsel %vm211, %v215, 0.0
        %v217 = vstv %s174
        %v218 = vsel %vm211, %v217, 0.0
        %s219 = sadd.s32 %s145, 16
        %s220 = sld [smem:[#allocation2 + %s219]]
        %s221 = sadd.s32 %s145, 17
        %s222 = sld [smem:[#allocation2 + %s221]]
        %s223 = sadd.s32 %s145, 18
        %s224 = sld [smem:[#allocation2 + %s223]]
        %s225 = sadd.s32 %s145, 19
        %s226 = sld [smem:[#allocation2 + %s225]]
        %s227 = sadd.s32 %s145, 20
        %s228 = sld [smem:[#allocation2 + %s227]]
        %s229 = sadd.s32 %s145, 21
        %s230 = sld [smem:[#allocation2 + %s229]]
        %s231 = sadd.s32 %s145, 22
        %s232 = sld [smem:[#allocation2 + %s231]]
        %s233 = sadd.s32 %s145, 23
        %s234 = sld [smem:[#allocation2 + %s233]]
        %s235 = sadd.s32 %s145, 24
        %s236 = sld [smem:[#allocation2 + %s235]]
        %s237 = sadd.s32 %s145, 25
        %s238 = sld [smem:[#allocation2 + %s237]]
        %s239 = sadd.s32 %s145, 26
        %s240 = sld [smem:[#allocation2 + %s239]]
        %s241 = sadd.s32 %s145, 27
        %s242 = sld [smem:[#allocation2 + %s241]]
        %s243 = sadd.s32 %s145, 28
        %s244 = sld [smem:[#allocation2 + %s243]]
        %s245 = sadd.s32 %s145, 29
        %s246 = sld [smem:[#allocation2 + %s245]]
        %s247 = sadd.s32 %s145, 30
        %s248 = sld [smem:[#allocation2 + %s247]]
        %v249 = vstv %s220
        %v250 = vmul.f32 %v249, %v138
        %v251 = vstv %s222
        %v252 = vmul.f32 %v251, %v136
        %v253 = vadd.f32 %v250, %v252
        %v254 = vstv %s224
        %v255 = vadd.f32 %v253, %v254
        %v256 = vstv %s226
        %v257 = vmul.f32 %v256, %v138
        %v258 = vstv %s228
        %v259 = vmul.f32 %v258, %v136
        %v260 = vadd.f32 %v257, %v259
        %v261 = vstv %s230
        %v262 = vadd.f32 %v260, %v261
        %v263 = vstv %s232
        %v264 = vmul.f32 %v263, %v138
        %v265 = vstv %s234
        %v266 = vmul.f32 %v265, %v136
        %v267 = vadd.f32 %v264, %v266
        %v268 = vstv %s236
        %v269 = vadd.f32 %v267, %v268
        %vm270 = vcmp.ge.f32.partialorder %v255, 0.0
        %vm271 = vcmp.ge.f32.partialorder %v262, 0.0
        %vm272 = vmand %vm270, %vm271
        %vm273 = vcmp.ge.f32.partialorder %v269, 0.0
        %vm274 = vmand %vm272, %vm273
        %v275 = vstv %s238
        %v276 = vmul.f32 %v275, %v136
        %v277 = vstv %s240
        %v278 = vmul.f32 %v277, %v138
        %v279 = vadd.f32 %v276, %v278
        %v280 = vstv %s242
        %v281 = vadd.f32 %v279, %v280
        %vm282 = vcmp.gt.f32.partialorder %v281, 0.0
        %vm283 = vmand %vm274, %vm282
        %vm284 = vcmp.lt.f32.partialorder %v281, %v212
        %vm285 = vmand %vm283, %vm284
        %v286 = vsel %vm285, %v281, %v212
        %v287 = vstv %s244
        %v288 = vsel %vm285, %v287, %v214
        %v289 = vstv %s246
        %v290 = vsel %vm285, %v289, %v216
        %v291 = vstv %s248
        %v292 = vsel %vm285, %v291, %v218
        %s293 = sadd.s32 %s145, 32
        %s294 = sld [smem:[#allocation2 + %s293]]
        %s295 = sadd.s32 %s145, 33
        %s296 = sld [smem:[#allocation2 + %s295]]
        %s297 = sadd.s32 %s145, 34
        %s298 = sld [smem:[#allocation2 + %s297]]
        %s299 = sadd.s32 %s145, 35
        %s300 = sld [smem:[#allocation2 + %s299]]
        %s301 = sadd.s32 %s145, 36
        %s302 = sld [smem:[#allocation2 + %s301]]
        %s303 = sadd.s32 %s145, 37
        %s304 = sld [smem:[#allocation2 + %s303]]
        %s305 = sadd.s32 %s145, 38
        %s306 = sld [smem:[#allocation2 + %s305]]
        %s307 = sadd.s32 %s145, 39
        %s308 = sld [smem:[#allocation2 + %s307]]
        %s309 = sadd.s32 %s145, 40
        %s310 = sld [smem:[#allocation2 + %s309]]
        %s311 = sadd.s32 %s145, 41
        %s312 = sld [smem:[#allocation2 + %s311]]
        %s313 = sadd.s32 %s145, 42
        %s314 = sld [smem:[#allocation2 + %s313]]
        %s315 = sadd.s32 %s145, 43
        %s316 = sld [smem:[#allocation2 + %s315]]
        %s317 = sadd.s32 %s145, 44
        %s318 = sld [smem:[#allocation2 + %s317]]
        %s319 = sadd.s32 %s145, 45
        %s320 = sld [smem:[#allocation2 + %s319]]
        %s321 = sadd.s32 %s145, 46
        %s322 = sld [smem:[#allocation2 + %s321]]
        %v323 = vstv %s294
        %v324 = vmul.f32 %v323, %v138
        %v325 = vstv %s296
        %v326 = vmul.f32 %v325, %v136
        %v327 = vadd.f32 %v324, %v326
        %v328 = vstv %s298
        %v329 = vadd.f32 %v327, %v328
        %v330 = vstv %s300
        %v331 = vmul.f32 %v330, %v138
        %v332 = vstv %s302
        %v333 = vmul.f32 %v332, %v136
        %v334 = vadd.f32 %v331, %v333
        %v335 = vstv %s304
        %v336 = vadd.f32 %v334, %v335
        %v337 = vstv %s306
        %v338 = vmul.f32 %v337, %v138
        %v339 = vstv %s308
        %v340 = vmul.f32 %v339, %v136
        %v341 = vadd.f32 %v338, %v340
        %v342 = vstv %s310
        %v343 = vadd.f32 %v341, %v342
        %vm344 = vcmp.ge.f32.partialorder %v329, 0.0
        %vm345 = vcmp.ge.f32.partialorder %v336, 0.0
        %vm346 = vmand %vm344, %vm345
        %vm347 = vcmp.ge.f32.partialorder %v343, 0.0
        %vm348 = vmand %vm346, %vm347
        %v349 = vstv %s312
        %v350 = vmul.f32 %v349, %v136
        %v351 = vstv %s314
        %v352 = vmul.f32 %v351, %v138
        %v353 = vadd.f32 %v350, %v352
        %v354 = vstv %s316
        %v355 = vadd.f32 %v353, %v354
        %vm356 = vcmp.gt.f32.partialorder %v355, 0.0
        %vm357 = vmand %vm348, %vm356
        %vm358 = vcmp.lt.f32.partialorder %v355, %v286
        %vm359 = vmand %vm357, %vm358
        %v360 = vsel %vm359, %v355, %v286
        %v361 = vstv %s318
        %v362 = vsel %vm359, %v361, %v288
        %v363 = vstv %s320
        %v364 = vsel %vm359, %v363, %v290
        %v365 = vstv %s322
        %v366 = vsel %vm359, %v365, %v292
        %s367 = sadd.s32 %s145, 48
        %s368 = sld [smem:[#allocation2 + %s367]]
        %s369 = sadd.s32 %s145, 49
        %s370 = sld [smem:[#allocation2 + %s369]]
        %s371 = sadd.s32 %s145, 50
        %s372 = sld [smem:[#allocation2 + %s371]]
        %s373 = sadd.s32 %s145, 51
        %s374 = sld [smem:[#allocation2 + %s373]]
        %s375 = sadd.s32 %s145, 52
        %s376 = sld [smem:[#allocation2 + %s375]]
        %s377 = sadd.s32 %s145, 53
        %s378 = sld [smem:[#allocation2 + %s377]]
        %s379 = sadd.s32 %s145, 54
        %s380 = sld [smem:[#allocation2 + %s379]]
        %s381 = sadd.s32 %s145, 55
        %s382 = sld [smem:[#allocation2 + %s381]]
        %s383 = sadd.s32 %s145, 56
        %s384 = sld [smem:[#allocation2 + %s383]]
        %s385 = sadd.s32 %s145, 57
        %s386 = sld [smem:[#allocation2 + %s385]]
        %s387 = sadd.s32 %s145, 58
        %s388 = sld [smem:[#allocation2 + %s387]]
        %s389 = sadd.s32 %s145, 59
        %s390 = sld [smem:[#allocation2 + %s389]]
        %s391 = sadd.s32 %s145, 60
        %s392 = sld [smem:[#allocation2 + %s391]]
        %s393 = sadd.s32 %s145, 61
        %s394 = sld [smem:[#allocation2 + %s393]]
        %s395 = sadd.s32 %s145, 62
        %s396 = sld [smem:[#allocation2 + %s395]]
        %v397 = vstv %s368
        %v398 = vmul.f32 %v397, %v138
        %v399 = vstv %s370
        %v400 = vmul.f32 %v399, %v136
        %v401 = vadd.f32 %v398, %v400
        %v402 = vstv %s372
        %v403 = vadd.f32 %v401, %v402
        %v404 = vstv %s374
        %v405 = vmul.f32 %v404, %v138
        %v406 = vstv %s376
        %v407 = vmul.f32 %v406, %v136
        %v408 = vadd.f32 %v405, %v407
        %v409 = vstv %s378
        %v410 = vadd.f32 %v408, %v409
        %v411 = vstv %s380
        %v412 = vmul.f32 %v411, %v138
        %v413 = vstv %s382
        %v414 = vmul.f32 %v413, %v136
        %v415 = vadd.f32 %v412, %v414
        %v416 = vstv %s384
        %v417 = vadd.f32 %v415, %v416
        %vm418 = vcmp.ge.f32.partialorder %v403, 0.0
        %vm419 = vcmp.ge.f32.partialorder %v410, 0.0
        %vm420 = vmand %vm418, %vm419
        %vm421 = vcmp.ge.f32.partialorder %v417, 0.0
        %vm422 = vmand %vm420, %vm421
        %v423 = vstv %s386
        %v424 = vmul.f32 %v423, %v136
        %v425 = vstv %s388
        %v426 = vmul.f32 %v425, %v138
        %v427 = vadd.f32 %v424, %v426
        %v428 = vstv %s390
        %v429 = vadd.f32 %v427, %v428
        %vm430 = vcmp.gt.f32.partialorder %v429, 0.0
        %vm431 = vmand %vm422, %vm430
        %vm432 = vcmp.lt.f32.partialorder %v429, %v360
        %vm433 = vmand %vm431, %vm432
        %v434 = vsel %vm433, %v429, %v360
        %v435 = vstv %s392
        %v436 = vsel %vm433, %v435, %v362
        %v437 = vstv %s394
        %v438 = vsel %vm433, %v437, %v364
        %v439 = vstv %s396
        %v440 = vsel %vm433, %v439, %v366
        %s441 = sadd.s32 %s145, 64
        %s442 = sld [smem:[#allocation2 + %s441]]
        %s443 = sadd.s32 %s145, 65
        %s444 = sld [smem:[#allocation2 + %s443]]
        %s445 = sadd.s32 %s145, 66
        %s446 = sld [smem:[#allocation2 + %s445]]
        %s447 = sadd.s32 %s145, 67
        %s448 = sld [smem:[#allocation2 + %s447]]
        %s449 = sadd.s32 %s145, 68
        %s450 = sld [smem:[#allocation2 + %s449]]
        %s451 = sadd.s32 %s145, 69
        %s452 = sld [smem:[#allocation2 + %s451]]
        %s453 = sadd.s32 %s145, 70
        %s454 = sld [smem:[#allocation2 + %s453]]
        %s455 = sadd.s32 %s145, 71
        %s456 = sld [smem:[#allocation2 + %s455]]
        %s457 = sadd.s32 %s145, 72
        %s458 = sld [smem:[#allocation2 + %s457]]
        %s459 = sadd.s32 %s145, 73
        %s460 = sld [smem:[#allocation2 + %s459]]
        %s461 = sadd.s32 %s145, 74
        %s462 = sld [smem:[#allocation2 + %s461]]
        %s463 = sadd.s32 %s145, 75
        %s464 = sld [smem:[#allocation2 + %s463]]
        %s465 = sadd.s32 %s145, 76
        %s466 = sld [smem:[#allocation2 + %s465]]
        %s467 = sadd.s32 %s145, 77
        %s468 = sld [smem:[#allocation2 + %s467]]
        %s469 = sadd.s32 %s145, 78
        %s470 = sld [smem:[#allocation2 + %s469]]
        %v471 = vstv %s442
        %v472 = vmul.f32 %v471, %v138
        %v473 = vstv %s444
        %v474 = vmul.f32 %v473, %v136
        %v475 = vadd.f32 %v472, %v474
        %v476 = vstv %s446
        %v477 = vadd.f32 %v475, %v476
        %v478 = vstv %s448
        %v479 = vmul.f32 %v478, %v138
        %v480 = vstv %s450
        %v481 = vmul.f32 %v480, %v136
        %v482 = vadd.f32 %v479, %v481
        %v483 = vstv %s452
        %v484 = vadd.f32 %v482, %v483
        %v485 = vstv %s454
        %v486 = vmul.f32 %v485, %v138
        %v487 = vstv %s456
        %v488 = vmul.f32 %v487, %v136
        %v489 = vadd.f32 %v486, %v488
        %v490 = vstv %s458
        %v491 = vadd.f32 %v489, %v490
        %vm492 = vcmp.ge.f32.partialorder %v477, 0.0
        %vm493 = vcmp.ge.f32.partialorder %v484, 0.0
        %vm494 = vmand %vm492, %vm493
        %vm495 = vcmp.ge.f32.partialorder %v491, 0.0
        %vm496 = vmand %vm494, %vm495
        %v497 = vstv %s460
        %v498 = vmul.f32 %v497, %v136
        %v499 = vstv %s462
        %v500 = vmul.f32 %v499, %v138
        %v501 = vadd.f32 %v498, %v500
        %v502 = vstv %s464
        %v503 = vadd.f32 %v501, %v502
        %vm504 = vcmp.gt.f32.partialorder %v503, 0.0
        %vm505 = vmand %vm496, %vm504
        %vm506 = vcmp.lt.f32.partialorder %v503, %v434
        %vm507 = vmand %vm505, %vm506
        %v508 = vsel %vm507, %v503, %v434
        %v509 = vstv %s466
        %v510 = vsel %vm507, %v509, %v436
        %v511 = vstv %s468
        %v512 = vsel %vm507, %v511, %v438
        %v513 = vstv %s470
        %v514 = vsel %vm507, %v513, %v440
        %s515 = sadd.s32 %s145, 80
        %s516 = sld [smem:[#allocation2 + %s515]]
        %s517 = sadd.s32 %s145, 81
        %s518 = sld [smem:[#allocation2 + %s517]]
        %s519 = sadd.s32 %s145, 82
        %s520 = sld [smem:[#allocation2 + %s519]]
        %s521 = sadd.s32 %s145, 83
        %s522 = sld [smem:[#allocation2 + %s521]]
        %s523 = sadd.s32 %s145, 84
        %s524 = sld [smem:[#allocation2 + %s523]]
        %s525 = sadd.s32 %s145, 85
        %s526 = sld [smem:[#allocation2 + %s525]]
        %s527 = sadd.s32 %s145, 86
        %s528 = sld [smem:[#allocation2 + %s527]]
        %s529 = sadd.s32 %s145, 87
        %s530 = sld [smem:[#allocation2 + %s529]]
        %s531 = sadd.s32 %s145, 88
        %s532 = sld [smem:[#allocation2 + %s531]]
        %s533 = sadd.s32 %s145, 89
        %s534 = sld [smem:[#allocation2 + %s533]]
        %s535 = sadd.s32 %s145, 90
        %s536 = sld [smem:[#allocation2 + %s535]]
        %s537 = sadd.s32 %s145, 91
        %s538 = sld [smem:[#allocation2 + %s537]]
        %s539 = sadd.s32 %s145, 92
        %s540 = sld [smem:[#allocation2 + %s539]]
        %s541 = sadd.s32 %s145, 93
        %s542 = sld [smem:[#allocation2 + %s541]]
        %s543 = sadd.s32 %s145, 94
        %s544 = sld [smem:[#allocation2 + %s543]]
        %v545 = vstv %s516
        %v546 = vmul.f32 %v545, %v138
        %v547 = vstv %s518
        %v548 = vmul.f32 %v547, %v136
        %v549 = vadd.f32 %v546, %v548
        %v550 = vstv %s520
        %v551 = vadd.f32 %v549, %v550
        %v552 = vstv %s522
        %v553 = vmul.f32 %v552, %v138
        %v554 = vstv %s524
        %v555 = vmul.f32 %v554, %v136
        %v556 = vadd.f32 %v553, %v555
        %v557 = vstv %s526
        %v558 = vadd.f32 %v556, %v557
        %v559 = vstv %s528
        %v560 = vmul.f32 %v559, %v138
        %v561 = vstv %s530
        %v562 = vmul.f32 %v561, %v136
        %v563 = vadd.f32 %v560, %v562
        %v564 = vstv %s532
        %v565 = vadd.f32 %v563, %v564
        %vm566 = vcmp.ge.f32.partialorder %v551, 0.0
        %vm567 = vcmp.ge.f32.partialorder %v558, 0.0
        %vm568 = vmand %vm566, %vm567
        %vm569 = vcmp.ge.f32.partialorder %v565, 0.0
        %vm570 = vmand %vm568, %vm569
        %v571 = vstv %s534
        %v572 = vmul.f32 %v571, %v136
        %v573 = vstv %s536
        %v574 = vmul.f32 %v573, %v138
        %v575 = vadd.f32 %v572, %v574
        %v576 = vstv %s538
        %v577 = vadd.f32 %v575, %v576
        %vm578 = vcmp.gt.f32.partialorder %v577, 0.0
        %vm579 = vmand %vm570, %vm578
        %vm580 = vcmp.lt.f32.partialorder %v577, %v508
        %vm581 = vmand %vm579, %vm580
        %v582 = vsel %vm581, %v577, %v508
        %v583 = vstv %s540
        %v584 = vsel %vm581, %v583, %v510
        %v585 = vstv %s542
        %v586 = vsel %vm581, %v585, %v512
        %v587 = vstv %s544
        %v588 = vsel %vm581, %v587, %v514
        %s589 = sadd.s32 %s145, 96
        %s590 = sld [smem:[#allocation2 + %s589]]
        %s591 = sadd.s32 %s145, 97
        %s592 = sld [smem:[#allocation2 + %s591]]
        %s593 = sadd.s32 %s145, 98
        %s594 = sld [smem:[#allocation2 + %s593]]
        %s595 = sadd.s32 %s145, 99
        %s596 = sld [smem:[#allocation2 + %s595]]
        %s597 = sadd.s32 %s145, 100
        %s598 = sld [smem:[#allocation2 + %s597]]
        %s599 = sadd.s32 %s145, 101
        %s600 = sld [smem:[#allocation2 + %s599]]
        %s601 = sadd.s32 %s145, 102
        %s602 = sld [smem:[#allocation2 + %s601]]
        %s603 = sadd.s32 %s145, 103
        %s604 = sld [smem:[#allocation2 + %s603]]
        %s605 = sadd.s32 %s145, 104
        %s606 = sld [smem:[#allocation2 + %s605]]
        %s607 = sadd.s32 %s145, 105
        %s608 = sld [smem:[#allocation2 + %s607]]
        %s609 = sadd.s32 %s145, 106
        %s610 = sld [smem:[#allocation2 + %s609]]
        %s611 = sadd.s32 %s145, 107
        %s612 = sld [smem:[#allocation2 + %s611]]
        %s613 = sadd.s32 %s145, 108
        %s614 = sld [smem:[#allocation2 + %s613]]
        %s615 = sadd.s32 %s145, 109
        %s616 = sld [smem:[#allocation2 + %s615]]
        %s617 = sadd.s32 %s145, 110
        %s618 = sld [smem:[#allocation2 + %s617]]
        %v619 = vstv %s590
        %v620 = vmul.f32 %v619, %v138
        %v621 = vstv %s592
        %v622 = vmul.f32 %v621, %v136
        %v623 = vadd.f32 %v620, %v622
        %v624 = vstv %s594
        %v625 = vadd.f32 %v623, %v624
        %v626 = vstv %s596
        %v627 = vmul.f32 %v626, %v138
        %v628 = vstv %s598
        %v629 = vmul.f32 %v628, %v136
        %v630 = vadd.f32 %v627, %v629
        %v631 = vstv %s600
        %v632 = vadd.f32 %v630, %v631
        %v633 = vstv %s602
        %v634 = vmul.f32 %v633, %v138
        %v635 = vstv %s604
        %v636 = vmul.f32 %v635, %v136
        %v637 = vadd.f32 %v634, %v636
        %v638 = vstv %s606
        %v639 = vadd.f32 %v637, %v638
        %vm640 = vcmp.ge.f32.partialorder %v625, 0.0
        %vm641 = vcmp.ge.f32.partialorder %v632, 0.0
        %vm642 = vmand %vm640, %vm641
        %vm643 = vcmp.ge.f32.partialorder %v639, 0.0
        %vm644 = vmand %vm642, %vm643
        %v645 = vstv %s608
        %v646 = vmul.f32 %v645, %v136
        %v647 = vstv %s610
        %v648 = vmul.f32 %v647, %v138
        %v649 = vadd.f32 %v646, %v648
        %v650 = vstv %s612
        %v651 = vadd.f32 %v649, %v650
        %vm652 = vcmp.gt.f32.partialorder %v651, 0.0
        %vm653 = vmand %vm644, %vm652
        %vm654 = vcmp.lt.f32.partialorder %v651, %v582
        %vm655 = vmand %vm653, %vm654
        %v656 = vsel %vm655, %v651, %v582
        %v657 = vstv %s614
        %v658 = vsel %vm655, %v657, %v584
        %v659 = vstv %s616
        %v660 = vsel %vm655, %v659, %v586
        %v661 = vstv %s618
        %v662 = vsel %vm655, %v661, %v588
        %s663 = sadd.s32 %s145, 112
        %s664 = sld [smem:[#allocation2 + %s663]]
        %s665 = sadd.s32 %s145, 113
        %s666 = sld [smem:[#allocation2 + %s665]]
        %s667 = sadd.s32 %s145, 114
        %s668 = sld [smem:[#allocation2 + %s667]]
        %s669 = sadd.s32 %s145, 115
        %s670 = sld [smem:[#allocation2 + %s669]]
        %s671 = sadd.s32 %s145, 116
        %s672 = sld [smem:[#allocation2 + %s671]]
        %s673 = sadd.s32 %s145, 117
        %s674 = sld [smem:[#allocation2 + %s673]]
        %s675 = sadd.s32 %s145, 118
        %s676 = sld [smem:[#allocation2 + %s675]]
        %s677 = sadd.s32 %s145, 119
        %s678 = sld [smem:[#allocation2 + %s677]]
        %s679 = sadd.s32 %s145, 120
        %s680 = sld [smem:[#allocation2 + %s679]]
        %s681 = sadd.s32 %s145, 121
        %s682 = sld [smem:[#allocation2 + %s681]]
        %s683 = sadd.s32 %s145, 122
        %s684 = sld [smem:[#allocation2 + %s683]]
        %s685 = sadd.s32 %s145, 123
        %s686 = sld [smem:[#allocation2 + %s685]]
        %s687 = sadd.s32 %s145, 124
        %s688 = sld [smem:[#allocation2 + %s687]]
        %s689 = sadd.s32 %s145, 125
        %s690 = sld [smem:[#allocation2 + %s689]]
        %s691 = sadd.s32 %s145, 126
        %s692 = sld [smem:[#allocation2 + %s691]]
        %v693 = vstv %s664
        %v694 = vmul.f32 %v693, %v138
        %v695 = vstv %s666
        %v696 = vmul.f32 %v695, %v136
        %v697 = vadd.f32 %v694, %v696
        %v698 = vstv %s668
        %v699 = vadd.f32 %v697, %v698
        %v700 = vstv %s670
        %v701 = vmul.f32 %v700, %v138
        %v702 = vstv %s672
        %v703 = vmul.f32 %v702, %v136
        %v704 = vadd.f32 %v701, %v703
        %v705 = vstv %s674
        %v706 = vadd.f32 %v704, %v705
        %v707 = vstv %s676
        %v708 = vmul.f32 %v707, %v138
        %v709 = vstv %s678
        %v710 = vmul.f32 %v709, %v136
        %v711 = vadd.f32 %v708, %v710
        %v712 = vstv %s680
        %v713 = vadd.f32 %v711, %v712
        %vm714 = vcmp.ge.f32.partialorder %v699, 0.0
        %vm715 = vcmp.ge.f32.partialorder %v706, 0.0
        %vm716 = vmand %vm714, %vm715
        %vm717 = vcmp.ge.f32.partialorder %v713, 0.0
        %vm718 = vmand %vm716, %vm717
        %v719 = vstv %s682
        %v720 = vmul.f32 %v719, %v136
        %v721 = vstv %s684
        %v722 = vmul.f32 %v721, %v138
        %v723 = vadd.f32 %v720, %v722
        %v724 = vstv %s686
        %v725 = vadd.f32 %v723, %v724
        %vm726 = vcmp.gt.f32.partialorder %v725, 0.0
        %vm727 = vmand %vm718, %vm726
        %vm728 = vcmp.lt.f32.partialorder %v725, %v656
        %vm729 = vmand %vm727, %vm728
        %v730 = vsel %vm729, %v725, %v656
        %v731 = vstv %s688
        %v732 = vsel %vm729, %v731, %v658
        %v733 = vstv %s690
        %v734 = vsel %vm729, %v733, %v660
        %v735 = vstv %s692
        %v736 = vsel %vm729, %v735, %v662
        %s737 = sadd.s32 %s145, 128
        %s738 = sld [smem:[#allocation2 + %s737]]
        %s739 = sadd.s32 %s145, 129
        %s740 = sld [smem:[#allocation2 + %s739]]
        %s741 = sadd.s32 %s145, 130
        %s742 = sld [smem:[#allocation2 + %s741]]
        %s743 = sadd.s32 %s145, 131
        %s744 = sld [smem:[#allocation2 + %s743]]
        %s745 = sadd.s32 %s145, 132
        %s746 = sld [smem:[#allocation2 + %s745]]
        %s747 = sadd.s32 %s145, 133
        %s748 = sld [smem:[#allocation2 + %s747]]
        %s749 = sadd.s32 %s145, 134
        %s750 = sld [smem:[#allocation2 + %s749]]
        %s751 = sadd.s32 %s145, 135
        %s752 = sld [smem:[#allocation2 + %s751]]
        %s753 = sadd.s32 %s145, 136
        %s754 = sld [smem:[#allocation2 + %s753]]
        %s755 = sadd.s32 %s145, 137
        %s756 = sld [smem:[#allocation2 + %s755]]
        %s757 = sadd.s32 %s145, 138
        %s758 = sld [smem:[#allocation2 + %s757]]
        %s759 = sadd.s32 %s145, 139
        %s760 = sld [smem:[#allocation2 + %s759]]
        %s761 = sadd.s32 %s145, 140
        %s762 = sld [smem:[#allocation2 + %s761]]
        %s763 = sadd.s32 %s145, 141
        %s764 = sld [smem:[#allocation2 + %s763]]
        %s765 = sadd.s32 %s145, 142
        %s766 = sld [smem:[#allocation2 + %s765]]
        %v767 = vstv %s738
        %v768 = vmul.f32 %v767, %v138
        %v769 = vstv %s740
        %v770 = vmul.f32 %v769, %v136
        %v771 = vadd.f32 %v768, %v770
        %v772 = vstv %s742
        %v773 = vadd.f32 %v771, %v772
        %v774 = vstv %s744
        %v775 = vmul.f32 %v774, %v138
        %v776 = vstv %s746
        %v777 = vmul.f32 %v776, %v136
        %v778 = vadd.f32 %v775, %v777
        %v779 = vstv %s748
        %v780 = vadd.f32 %v778, %v779
        %v781 = vstv %s750
        %v782 = vmul.f32 %v781, %v138
        %v783 = vstv %s752
        %v784 = vmul.f32 %v783, %v136
        %v785 = vadd.f32 %v782, %v784
        %v786 = vstv %s754
        %v787 = vadd.f32 %v785, %v786
        %vm788 = vcmp.ge.f32.partialorder %v773, 0.0
        %vm789 = vcmp.ge.f32.partialorder %v780, 0.0
        %vm790 = vmand %vm788, %vm789
        %vm791 = vcmp.ge.f32.partialorder %v787, 0.0
        %vm792 = vmand %vm790, %vm791
        %v793 = vstv %s756
        %v794 = vmul.f32 %v793, %v136
        %v795 = vstv %s758
        %v796 = vmul.f32 %v795, %v138
        %v797 = vadd.f32 %v794, %v796
        %v798 = vstv %s760
        %v799 = vadd.f32 %v797, %v798
        %vm800 = vcmp.gt.f32.partialorder %v799, 0.0
        %vm801 = vmand %vm792, %vm800
        %vm802 = vcmp.lt.f32.partialorder %v799, %v730
        %vm803 = vmand %vm801, %vm802
        %v804 = vsel %vm803, %v799, %v730
        %v805 = vstv %s762
        %v806 = vsel %vm803, %v805, %v732
        %v807 = vstv %s764
        %v808 = vsel %vm803, %v807, %v734
        %v809 = vstv %s766
        %v810 = vsel %vm803, %v809, %v736
        %s811 = sadd.s32 %s145, 144
        %s812 = sld [smem:[#allocation2 + %s811]]
        %s813 = sadd.s32 %s145, 145
        %s814 = sld [smem:[#allocation2 + %s813]]
        %s815 = sadd.s32 %s145, 146
        %s816 = sld [smem:[#allocation2 + %s815]]
        %s817 = sadd.s32 %s145, 147
        %s818 = sld [smem:[#allocation2 + %s817]]
        %s819 = sadd.s32 %s145, 148
        %s820 = sld [smem:[#allocation2 + %s819]]
        %s821 = sadd.s32 %s145, 149
        %s822 = sld [smem:[#allocation2 + %s821]]
        %s823 = sadd.s32 %s145, 150
        %s824 = sld [smem:[#allocation2 + %s823]]
        %s825 = sadd.s32 %s145, 151
        %s826 = sld [smem:[#allocation2 + %s825]]
        %s827 = sadd.s32 %s145, 152
        %s828 = sld [smem:[#allocation2 + %s827]]
        %s829 = sadd.s32 %s145, 153
        %s830 = sld [smem:[#allocation2 + %s829]]
        %s831 = sadd.s32 %s145, 154
        %s832 = sld [smem:[#allocation2 + %s831]]
        %s833 = sadd.s32 %s145, 155
        %s834 = sld [smem:[#allocation2 + %s833]]
        %s835 = sadd.s32 %s145, 156
        %s836 = sld [smem:[#allocation2 + %s835]]
        %s837 = sadd.s32 %s145, 157
        %s838 = sld [smem:[#allocation2 + %s837]]
        %s839 = sadd.s32 %s145, 158
        %s840 = sld [smem:[#allocation2 + %s839]]
        %v841 = vstv %s812
        %v842 = vmul.f32 %v841, %v138
        %v843 = vstv %s814
        %v844 = vmul.f32 %v843, %v136
        %v845 = vadd.f32 %v842, %v844
        %v846 = vstv %s816
        %v847 = vadd.f32 %v845, %v846
        %v848 = vstv %s818
        %v849 = vmul.f32 %v848, %v138
        %v850 = vstv %s820
        %v851 = vmul.f32 %v850, %v136
        %v852 = vadd.f32 %v849, %v851
        %v853 = vstv %s822
        %v854 = vadd.f32 %v852, %v853
        %v855 = vstv %s824
        %v856 = vmul.f32 %v855, %v138
        %v857 = vstv %s826
        %v858 = vmul.f32 %v857, %v136
        %v859 = vadd.f32 %v856, %v858
        %v860 = vstv %s828
        %v861 = vadd.f32 %v859, %v860
        %vm862 = vcmp.ge.f32.partialorder %v847, 0.0
        %vm863 = vcmp.ge.f32.partialorder %v854, 0.0
        %vm864 = vmand %vm862, %vm863
        %vm865 = vcmp.ge.f32.partialorder %v861, 0.0
        %vm866 = vmand %vm864, %vm865
        %v867 = vstv %s830
        %v868 = vmul.f32 %v867, %v136
        %v869 = vstv %s832
        %v870 = vmul.f32 %v869, %v138
        %v871 = vadd.f32 %v868, %v870
        %v872 = vstv %s834
        %v873 = vadd.f32 %v871, %v872
        %vm874 = vcmp.gt.f32.partialorder %v873, 0.0
        %vm875 = vmand %vm866, %vm874
        %vm876 = vcmp.lt.f32.partialorder %v873, %v804
        %vm877 = vmand %vm875, %vm876
        %v878 = vsel %vm877, %v873, %v804
        %v879 = vstv %s836
        %v880 = vsel %vm877, %v879, %v806
        %v881 = vstv %s838
        %v882 = vsel %vm877, %v881, %v808
        %v883 = vstv %s840
        %v884 = vsel %vm877, %v883, %v810
        %s885 = sadd.s32 %s145, 160
        %s886 = sld [smem:[#allocation2 + %s885]]
        %s887 = sadd.s32 %s145, 161
        %s888 = sld [smem:[#allocation2 + %s887]]
        %s889 = sadd.s32 %s145, 162
        %s890 = sld [smem:[#allocation2 + %s889]]
        %s891 = sadd.s32 %s145, 163
        %s892 = sld [smem:[#allocation2 + %s891]]
        %s893 = sadd.s32 %s145, 164
        %s894 = sld [smem:[#allocation2 + %s893]]
        %s895 = sadd.s32 %s145, 165
        %s896 = sld [smem:[#allocation2 + %s895]]
        %s897 = sadd.s32 %s145, 166
        %s898 = sld [smem:[#allocation2 + %s897]]
        %s899 = sadd.s32 %s145, 167
        %s900 = sld [smem:[#allocation2 + %s899]]
        %s901 = sadd.s32 %s145, 168
        %s902 = sld [smem:[#allocation2 + %s901]]
        %s903 = sadd.s32 %s145, 169
        %s904 = sld [smem:[#allocation2 + %s903]]
        %s905 = sadd.s32 %s145, 170
        %s906 = sld [smem:[#allocation2 + %s905]]
        %s907 = sadd.s32 %s145, 171
        %s908 = sld [smem:[#allocation2 + %s907]]
        %s909 = sadd.s32 %s145, 172
        %s910 = sld [smem:[#allocation2 + %s909]]
        %s911 = sadd.s32 %s145, 173
        %s912 = sld [smem:[#allocation2 + %s911]]
        %s913 = sadd.s32 %s145, 174
        %s914 = sld [smem:[#allocation2 + %s913]]
        %v915 = vstv %s886
        %v916 = vmul.f32 %v915, %v138
        %v917 = vstv %s888
        %v918 = vmul.f32 %v917, %v136
        %v919 = vadd.f32 %v916, %v918
        %v920 = vstv %s890
        %v921 = vadd.f32 %v919, %v920
        %v922 = vstv %s892
        %v923 = vmul.f32 %v922, %v138
        %v924 = vstv %s894
        %v925 = vmul.f32 %v924, %v136
        %v926 = vadd.f32 %v923, %v925
        %v927 = vstv %s896
        %v928 = vadd.f32 %v926, %v927
        %v929 = vstv %s898
        %v930 = vmul.f32 %v929, %v138
        %v931 = vstv %s900
        %v932 = vmul.f32 %v931, %v136
        %v933 = vadd.f32 %v930, %v932
        %v934 = vstv %s902
        %v935 = vadd.f32 %v933, %v934
        %vm936 = vcmp.ge.f32.partialorder %v921, 0.0
        %vm937 = vcmp.ge.f32.partialorder %v928, 0.0
        %vm938 = vmand %vm936, %vm937
        %vm939 = vcmp.ge.f32.partialorder %v935, 0.0
        %vm940 = vmand %vm938, %vm939
        %v941 = vstv %s904
        %v942 = vmul.f32 %v941, %v136
        %v943 = vstv %s906
        %v944 = vmul.f32 %v943, %v138
        %v945 = vadd.f32 %v942, %v944
        %v946 = vstv %s908
        %v947 = vadd.f32 %v945, %v946
        %vm948 = vcmp.gt.f32.partialorder %v947, 0.0
        %vm949 = vmand %vm940, %vm948
        %vm950 = vcmp.lt.f32.partialorder %v947, %v878
        %vm951 = vmand %vm949, %vm950
        %v952 = vsel %vm951, %v947, %v878
        %v953 = vstv %s910
        %v954 = vsel %vm951, %v953, %v880
        %v955 = vstv %s912
        %v956 = vsel %vm951, %v955, %v882
        %v957 = vstv %s914
        %v958 = vsel %vm951, %v957, %v884
        %s959 = sadd.s32 %s145, 176
        %s960 = sld [smem:[#allocation2 + %s959]]
        %s961 = sadd.s32 %s145, 177
        %s962 = sld [smem:[#allocation2 + %s961]]
        %s963 = sadd.s32 %s145, 178
        %s964 = sld [smem:[#allocation2 + %s963]]
        %s965 = sadd.s32 %s145, 179
        %s966 = sld [smem:[#allocation2 + %s965]]
        %s967 = sadd.s32 %s145, 180
        %s968 = sld [smem:[#allocation2 + %s967]]
        %s969 = sadd.s32 %s145, 181
        %s970 = sld [smem:[#allocation2 + %s969]]
        %s971 = sadd.s32 %s145, 182
        %s972 = sld [smem:[#allocation2 + %s971]]
        %s973 = sadd.s32 %s145, 183
        %s974 = sld [smem:[#allocation2 + %s973]]
        %s975 = sadd.s32 %s145, 184
        %s976 = sld [smem:[#allocation2 + %s975]]
        %s977 = sadd.s32 %s145, 185
        %s978 = sld [smem:[#allocation2 + %s977]]
        %s979 = sadd.s32 %s145, 186
        %s980 = sld [smem:[#allocation2 + %s979]]
        %s981 = sadd.s32 %s145, 187
        %s982 = sld [smem:[#allocation2 + %s981]]
        %s983 = sadd.s32 %s145, 188
        %s984 = sld [smem:[#allocation2 + %s983]]
        %s985 = sadd.s32 %s145, 189
        %s986 = sld [smem:[#allocation2 + %s985]]
        %s987 = sadd.s32 %s145, 190
        %s988 = sld [smem:[#allocation2 + %s987]]
        %v989 = vstv %s960
        %v990 = vmul.f32 %v989, %v138
        %v991 = vstv %s962
        %v992 = vmul.f32 %v991, %v136
        %v993 = vadd.f32 %v990, %v992
        %v994 = vstv %s964
        %v995 = vadd.f32 %v993, %v994
        %v996 = vstv %s966
        %v997 = vmul.f32 %v996, %v138
        %v998 = vstv %s968
        %v999 = vmul.f32 %v998, %v136
        %v1000 = vadd.f32 %v997, %v999
        %v1001 = vstv %s970
        %v1002 = vadd.f32 %v1000, %v1001
        %v1003 = vstv %s972
        %v1004 = vmul.f32 %v1003, %v138
        %v1005 = vstv %s974
        %v1006 = vmul.f32 %v1005, %v136
        %v1007 = vadd.f32 %v1004, %v1006
        %v1008 = vstv %s976
        %v1009 = vadd.f32 %v1007, %v1008
        %vm1010 = vcmp.ge.f32.partialorder %v995, 0.0
        %vm1011 = vcmp.ge.f32.partialorder %v1002, 0.0
        %vm1012 = vmand %vm1010, %vm1011
        %vm1013 = vcmp.ge.f32.partialorder %v1009, 0.0
        %vm1014 = vmand %vm1012, %vm1013
        %v1015 = vstv %s978
        %v1016 = vmul.f32 %v1015, %v136
        %v1017 = vstv %s980
        %v1018 = vmul.f32 %v1017, %v138
        %v1019 = vadd.f32 %v1016, %v1018
        %v1020 = vstv %s982
        %v1021 = vadd.f32 %v1019, %v1020
        %vm1022 = vcmp.gt.f32.partialorder %v1021, 0.0
        %vm1023 = vmand %vm1014, %vm1022
        %vm1024 = vcmp.lt.f32.partialorder %v1021, %v952
        %vm1025 = vmand %vm1023, %vm1024
        %v1026 = vstv %s984
        %v1027 = vsel %vm1025, %v1026, %v954
        %v1028 = vstv %s986
        %v1029 = vsel %vm1025, %v1028, %v956
        %v1030 = vstv %s988
        %v1031 = vsel %vm1025, %v1030, %v958
        %v1032 = vsub.f32 %v1027, %v140
        %v1033 = vsub.f32 %v1029, %v142
        %v1034 = vsub.f32 %v1031, %v144
        %v1035 = vmul.f32 %v1032, %v1032
        %v1036 = vadd.f32 %v1035, 0.0
        %v1037 = vmul.f32 %v1033, %v1033
        %v1038 = vadd.f32 %v1036, %v1037
        %v1039 = vmul.f32 %v1034, %v1034
        %v1040 = vadd.f32 %v1038, %v1039
        %1041 = vst [vmem:[%s135] sm:$0xff] %v1040
        %p1042 = scmp.lt.s32.totalorder %s14, 1
        %s1043 = scalar_select %p1042, %s14, 1
        %s1044 = smul.addr %s1043, 8
        %s1045 = scalar_lea.vmem %s2, %s1044
        // Predicated region
        $region33: #{mesh_renderer_forward.1} parent=27 // pred_check
          %p1046 = pneg %p74
        $region34: #{mesh_renderer_forward.1} parent=27 // pred_check_branch
          %1048 = sbr.rel (%p1046) target = $region36
        $region35: #{mesh_renderer_forward.1} parent=27 // pred_region
          _
        $region36: #{mesh_renderer_forward.1} parent=27 // pred_fallthru
          _
      $region28: #{mesh_renderer_forward.1} parent=5 // pred_fallthru
        _
      %p1049 = scmp.le.s32.totalorder 2, %s9
      // Predicated region
      $region37: #{mesh_renderer_forward.1} parent=5 // pred_check
        %p1050 = pneg %p1049
      $region38: #{mesh_renderer_forward.1} parent=5 // pred_check_branch
        %1052 = sbr.rel (%p1050) target = $region40
      $region39: #{mesh_renderer_forward.1} parent=5 // pred_region
        %s1053 = ssub.s32 %s9, 2
        // Predicated region
        $region41: #{mesh_renderer_forward.1} parent=39 // pred_check
          %p1054 = pneg %p80
        $region42: #{mesh_renderer_forward.1} parent=39 // pred_check_branch
          %1056 = sbr.rel (%p1054) target = $region44
        $region43: #{mesh_renderer_forward.1} parent=39 // pred_region
          %p1057 = scmp.lt.s32.totalorder %s15, 1
          %s1058 = scalar_select %p1057, %s15, 1
          %s1059 = smul.addr %s1058, 8
          %s1060 = scalar_lea.vmem %s2, %s1059
        $region44: #{mesh_renderer_forward.1} parent=39 // pred_fallthru
          _
      $region40: #{mesh_renderer_forward.1} parent=5 // pred_fallthru
        _
    $region6: #{mesh_renderer_forward.1} parent=1 // loop_footer
      %s13 = sadd.s32 1, %s9
    $region7: #{mesh_renderer_forward.1} parent=1 // loop_footer_branch
      %8 = sbr.rel target = $region3
    $region8: #{mesh_renderer_forward.1} parent=1 // loop_exit
      _
    %1061 = vsyncpa [#allocation3], 1
    %s1062 = scalar_lea.sflag [#allocation3], 1
    %1063 = vsyncpa %s1062, 1

</llo_original>
